<compile_context>
chip_gen: v7x
topology: tpu7x:2x2x1
jax: 0.10.0
libtpu: 0.0.40
codegen_flags: <defaults>
</compile_context>

<pallas_src>
import numpy as np
import jax
import jax.numpy as jnp
from jax import lax
from jax.experimental import pallas as pl
from jax.experimental.pallas import tpu as pltpu


# ---------------------------------------------------------------------------
# Fused Pallas kernel
# ---------------------------------------------------------------------------
def _make_basenet_kernel(B):
    n_phase = 16 * B          # rows per conv1 pool-phase block

    def kernel(lhs_ref, w1_ref, b1_ref, w2_ref, b2_ref,
               wf1_ref, bf1_ref, wf2_ref, bf2_ref,
               o_ref, h1_ref, p2_ref):
        f32 = jnp.float32

        # ---- conv1 (+ pool phases folded into rows): ONE lane-dense MXU matmul ----
        c1 = jnp.dot(lhs_ref[...], w1_ref[...], preferred_element_type=f32)   # (64B, 128)
        n = n_phase
        m = jnp.maximum(jnp.maximum(c1[0:n], c1[n:2 * n]),
                        jnp.maximum(c1[2 * n:3 * n], c1[3 * n:4 * n]))
        # rows = (row-parity, i8, batch); lanes = (col-parity, j8, channel); one bulk store.
        h1_ref[...] = jnp.maximum(m + b1_ref[...], 0.0)                        # (16B, 128)

        # ---- conv2 + ReLU + 2x2 pool: 10 accumulating matmuls with banded weights ----
        accs = []
        for di in range(2):                       # conv2 pool row-phase
            acc = None
            for kh in range(5):                   # conv2 kernel row
                p = di + kh
                r_par, r0 = p % 2, p // 2
                lhs2 = h1_ref[pl.ds(r_par * 8 * B + r0 * B, 6 * B), :]         # (6B, 128)
                d = jnp.dot(lhs2, w2_ref[kh], preferred_element_type=f32)      # (6B, 256)
                acc = d if acc is None else acc + d
            accs.append(acc)
        pooled = jnp.maximum(jnp.maximum(accs[0][:, 0:128], accs[0][:, 128:256]),
                             jnp.maximum(accs[1][:, 0:128], accs[1][:, 128:256]))
        # rows = (i6, batch); lanes = (j6, out-channel); one bulk store.
        p2_ref[...] = jnp.maximum(pooled + b2_ref[...], 0.0)                   # (6B, 128)

        # ---- fc1: flatten folded into the weights -> 6 accumulating matmuls ----
        h = None
        for i6 in range(6):
            d = jnp.dot(p2_ref[pl.ds(i6 * B, B), :], wf1_ref[i6],
                        preferred_element_type=f32)                            # (B, 128)
            h = d if h is None else h + d
        h = jnp.maximum(h + bf1_ref[...], 0.0)                                 # (B, 128)

        # ---- fc2 (output padded to 128 lanes; wrapper slices to 2) ----
        o_ref[...] = (jnp.dot(h, wf2_ref[...], preferred_element_type=f32)
                      + bf2_ref[...]).astype(o_ref.dtype)

    return kernel


# ---------------------------------------------------------------------------
# Host-side (one-time) weight re-layouts
# ---------------------------------------------------------------------------
def _conv2_band_selector():
    # S[c_par, j8, dj, j6, kw] = 1 iff pooled-conv1 column (2*j8 + c_par) == 2*j6 + dj + kw
    S = np.zeros((2, 8, 2, 6, 5), np.float32)
    for c_par in range(2):
        for j8 in range(8):
            for dj in range(2):
                for j6 in range(6):
                    kw = 2 * (j8 - j6) + c_par - dj
                    if 0 <= kw <= 4:
                        S[c_par, j8, dj, j6, kw] = 1.0
    return S


_CONV2_SEL = _conv2_band_selector()


def _prepare_weights(params):
    f32 = jnp.float32
    # conv1: block-diagonal (512, 128); K block (c_par, j8) -> lanes idx*6 .. idx*6+5
    w1m = params["conv1_w"].reshape(6, 25).T.astype(f32)                        # (25, 6) [k, c]
    w1b = jnp.einsum("ij,kc->ikjc", jnp.eye(16, dtype=f32), w1m).reshape(400, 96)
    w1b = jnp.pad(w1b, ((0, 112), (0, 32)))                                     # (512, 128)
    b1 = jnp.pad(jnp.tile(params["conv1_b"].astype(f32), 16), (0, 32)).reshape(1, 128)

    # conv2: banded (5, 128, 256); rows = (c_par, j8, c), cols = (dj, j6, o)
    sel = jnp.asarray(_CONV2_SEL)
    w2core = jnp.einsum("pjdqw,ockw->kpjcdqo", sel, params["conv2_w"].astype(f32))
    w2core = w2core.reshape(5, 96, 2, 96)
    w2b = jnp.pad(w2core, ((0, 0), (0, 32), (0, 0), (0, 32))).reshape(5, 128, 256)
    b2 = jnp.pad(jnp.tile(params["conv2_b"].astype(f32), 6), (0, 32)).reshape(1, 128)

    # fc1: PyTorch flatten order (o*36 + i6*6 + j6) folded into 6 per-row-block weights
    wf1 = params["fc1_w"].astype(f32).reshape(120, 16, 6, 6).transpose(2, 3, 1, 0)
    wf1 = jnp.pad(wf1.reshape(6, 96, 120), ((0, 0), (0, 32), (0, 8)))           # (6, 128, 128)
    bf1 = jnp.pad(params["fc1_b"].astype(f32), (0, 8)).reshape(1, 128)

    wf2 = jnp.pad(params["fc2_w"].astype(f32).T, ((0, 8), (0, 126)))            # (128, 128)
    bf2 = jnp.pad(params["fc2_b"].astype(f32), (0, 126)).reshape(1, 128)
    return w1b, b1, w2b, b2, wf1, bf1, wf2, bf2


# ---------------------------------------------------------------------------
# Wrapper
# ---------------------------------------------------------------------------
def basenet_v2_forward(x_nchw, params):
    B = x_nchw.shape[0]
    f32 = jnp.float32

    # conv1 im2col LHS: rows = (pool-phase a, pool-phase b, row-parity, i8, batch),
    #                   cols = (col-parity, j8, tap k), K padded 400 -> 512 lanes.
    p = lax.conv_general_dilated_patches(x_nchw.astype(f32), (5, 5), (1, 1), "VALID")
    p = p.reshape(B, 25, 8, 2, 2, 8, 2, 2)           # (b, k, i8, r_par, a, j8, c_par, bph)
    p = jnp.transpose(p, (4, 7, 3, 2, 0, 6, 5, 1))   # (a, bph, r_par, i8, b, c_par, j8, k)
    lhs = jnp.pad(p.reshape(64 * B, 400), ((0, 0), (0, 112)))                   # (64B, 512)

    w1b, b1, w2b, b2, wf1, bf1, wf2, bf2 = _prepare_weights(params)

    vmem = pltpu.MemorySpace.VMEM
    out = pl.pallas_call(
        _make_basenet_kernel(B),
        out_shape=jax.ShapeDtypeStruct((B, 128), f32),
        in_specs=[pl.BlockSpec(memory_space=vmem) for _ in range(9)],
        out_specs=pl.BlockSpec(memory_space=vmem),
        scratch_shapes=[
            pltpu.VMEM((16 * B, 128), f32),   # pooled conv1 activation (lane-dense)
            pltpu.VMEM((6 * B, 128), f32),    # pooled conv2 activation (lane-dense)
        ],
        compiler_params=pltpu.CompilerParams(vmem_limit_bytes=32 * 1024 * 1024),
    )(lhs, w1b, b1, w2b, b2, wf1, bf1, wf2, bf2)
    return out[:, :2]


# ---------------------------------------------------------------------------
# Pure-JAX reference (for correctness check)
# ---------------------------------------------------------------------------
def basenet_v2_reference(x_nchw, params):
    dn = ("NCHW", "OIHW", "NCHW")
    y = lax.conv_general_dilated(x_nchw, params["conv1_w"], (1, 1), "VALID",
                                 dimension_numbers=dn)
    y = jnp.maximum(y + params["conv1_b"][None, :, None, None], 0.0)
    y = lax.reduce_window(y, -jnp.inf, lax.max, (1, 1, 2, 2), (1, 1, 2, 2), "VALID")
    y = lax.conv_general_dilated(y, params["conv2_w"], (1, 1), "VALID",
                                 dimension_numbers=dn)
    y = jnp.maximum(y + params["conv2_b"][None, :, None, None], 0.0)
    y = lax.reduce_window(y, -jnp.inf, lax.max, (1, 1, 2, 2), (1, 1, 2, 2), "VALID")
    y = y.reshape(y.shape[0], -1)
    y = jnp.maximum(y @ params["fc1_w"].T + params["fc1_b"], 0.0)
    return y @ params["fc2_w"].T + params["fc2_b"]


# ---------------------------------------------------------------------------
if __name__ == "__main__":
    key = jax.random.PRNGKey(0)
    ks = jax.random.split(key, 9)

    def u(k, shape, fan_in):
        bound = 1.0 / (fan_in ** 0.5)
        return jax.random.uniform(k, shape, jnp.float32, -bound, bound)

    params = {
        "conv1_w": u(ks[0], (6, 1, 5, 5), 25),
        "conv1_b": u(ks[1], (6,), 25),
        "conv2_w": u(ks[2], (16, 6, 5, 5), 150),
        "conv2_b": u(ks[3], (16,), 150),
        "fc1_w": u(ks[4], (120, 576), 576),
        "fc1_b": u(ks[5], (120,), 576),
        "fc2_w": u(ks[6], (2, 120), 120),
        "fc2_b": u(ks[7], (2,), 120),
    }
    x = jax.random.normal(ks[8], (2, 1, 36, 36), jnp.float32)   # NCHW like PyTorch

    fwd = jax.jit(basenet_v2_forward)
    out = jax.block_until_ready(fwd(x, params))

    with jax.default_matmul_precision("float32"):
        ref = jax.block_until_ready(basenet_v2_reference(x, params))

    assert out.shape == (2, 2), out.shape
    assert jnp.allclose(out, ref, rtol=1e-3, atol=1e-3), (out, ref)
    print("KERNEL_OK")
</pallas_src>

<mosaic_0001>
module attributes {stable_mosaic.version = 11 : i64} {
  func.func @kernel(%arg0: memref<128x512xf32, #tpu.memory_space<vmem>>, %arg1: memref<512x128xf32, #tpu.memory_space<vmem>>, %arg2: memref<1x128xf32, #tpu.memory_space<vmem>>, %arg3: memref<5x128x256xf32, #tpu.memory_space<vmem>>, %arg4: memref<1x128xf32, #tpu.memory_space<vmem>>, %arg5: memref<6x128x128xf32, #tpu.memory_space<vmem>>, %arg6: memref<1x128xf32, #tpu.memory_space<vmem>>, %arg7: memref<128x128xf32, #tpu.memory_space<vmem>>, %arg8: memref<1x128xf32, #tpu.memory_space<vmem>>, %arg9: memref<2x128xf32, #tpu.memory_space<vmem>>, %arg10: memref<32x128xf32, #tpu.memory_space<vmem>>, %arg11: memref<12x128xf32, #tpu.memory_space<vmem>>) attributes {dimension_semantics = [], scalar_prefetch = 0 : i64, scratch_operands = 2 : i64, tpu.core_type = #tpu.core_type<tc>} {
    %c0 = arith.constant 0 : index
    %c0_0 = arith.constant 0 : index
    %0 = vector.load %arg0[%c0, %c0_0] : memref<128x512xf32, #tpu.memory_space<vmem>>, vector<128x512xf32>
    %c0_1 = arith.constant 0 : index
    %c0_2 = arith.constant 0 : index
    %1 = vector.load %arg1[%c0_1, %c0_2] : memref<512x128xf32, #tpu.memory_space<vmem>>, vector<512x128xf32>
    %cst = arith.constant dense<0.000000e+00> : vector<128x128xf32>
    %2 = tpu.matmul %0, %1, %cst {dimension_numbers = #tpu.dot_dimension_numbers<[1], [0], [0], [1], [0, 0, 1, 1], [], []>} : vector<128x512xf32>, vector<512x128xf32>, vector<128x128xf32> -> vector<128x128xf32>
    %3 = vector.extract_strided_slice %2 {offsets = [0, 0], sizes = [32, 128], strides = [1, 1]} : vector<128x128xf32> to vector<32x128xf32>
    %4 = vector.extract_strided_slice %2 {offsets = [32, 0], sizes = [32, 128], strides = [1, 1]} : vector<128x128xf32> to vector<32x128xf32>
    %5 = arith.maximumf %3, %4 : vector<32x128xf32>
    %6 = vector.extract_strided_slice %2 {offsets = [64, 0], sizes = [32, 128], strides = [1, 1]} : vector<128x128xf32> to vector<32x128xf32>
    %7 = vector.extract_strided_slice %2 {offsets = [96, 0], sizes = [32, 128], strides = [1, 1]} : vector<128x128xf32> to vector<32x128xf32>
    %8 = arith.maximumf %6, %7 : vector<32x128xf32>
    %9 = arith.maximumf %5, %8 : vector<32x128xf32>
    %c0_3 = arith.constant 0 : index
    %c0_4 = arith.constant 0 : index
    %10 = vector.load %arg2[%c0_3, %c0_4] : memref<1x128xf32, #tpu.memory_space<vmem>>, vector<1x128xf32>
    %11 = vector.broadcast %10 : vector<1x128xf32> to vector<32x128xf32>
    %12 = arith.addf %9, %11 : vector<32x128xf32>
    %cst_5 = arith.constant 0.000000e+00 : f32
    %13 = vector.broadcast %cst_5 : f32 to vector<32x128xf32>
    %14 = arith.maximumf %12, %13 : vector<32x128xf32>
    %c0_6 = arith.constant 0 : index
    %c0_7 = arith.constant 0 : index
    %15 = vector.load %arg10[%c0_6, %c0_7] : memref<32x128xf32, #tpu.memory_space<vmem>>, vector<32x128xf32>
    tpu.vector_store %arg10[%c0_6, %c0_7], %14 {strides = array<i32>} : memref<32x128xf32, #tpu.memory_space<vmem>>, vector<32x128xf32>,
    %c0_8 = arith.constant 0 : index
    %c0_9 = arith.constant 0 : index
    %16 = vector.load %arg10[%c0_8, %c0_9] : memref<32x128xf32, #tpu.memory_space<vmem>>, vector<12x128xf32>
    %c0_10 = arith.constant 0 : index
    %c0_11 = arith.constant 0 : index
    %c0_12 = arith.constant 0 : index
    %17 = vector.load %arg3[%c0_10, %c0_11, %c0_12] : memref<5x128x256xf32, #tpu.memory_space<vmem>>, vector<1x128x256xf32>
    %18 = vector.shape_cast %17 : vector<1x128x256xf32> to vector<128x256xf32>
    %cst_13 = arith.constant dense<0.000000e+00> : vector<12x256xf32>
    %19 = tpu.matmul %16, %18, %cst_13 {dimension_numbers = #tpu.dot_dimension_numbers<[1], [0], [0], [1], [0, 0, 1, 1], [], []>} : vector<12x128xf32>, vector<128x256xf32>, vector<12x256xf32> -> vector<12x256xf32>
    %c16 = arith.constant 16 : index
    %c0_14 = arith.constant 0 : index
    %20 = vector.load %arg10[%c16, %c0_14] : memref<32x128xf32, #tpu.memory_space<vmem>>, vector<12x128xf32>
    %c1 = arith.constant 1 : index
    %c0_15 = arith.constant 0 : index
    %c0_16 = arith.constant 0 : index
    %21 = vector.load %arg3[%c1, %c0_15, %c0_16] : memref<5x128x256xf32, #tpu.memory_space<vmem>>, vector<1x128x256xf32>
    %22 = vector.shape_cast %21 : vector<1x128x256xf32> to vector<128x256xf32>
    %cst_17 = arith.constant dense<0.000000e+00> : vector<12x256xf32>
    %23 = tpu.matmul %20, %22, %cst_17 {dimension_numbers = #tpu.dot_dimension_numbers<[1], [0], [0], [1], [0, 0, 1, 1], [], []>} : vector<12x128xf32>, vector<128x256xf32>, vector<12x256xf32> -> vector<12x256xf32>
    %24 = arith.addf %19, %23 : vector<12x256xf32>
    %c2 = arith.constant 2 : index
    %c0_18 = arith.constant 0 : index
    %25 = vector.load %arg10[%c2, %c0_18] : memref<32x128xf32, #tpu.memory_space<vmem>>, vector<12x128xf32>
    %c2_19 = arith.constant 2 : index
    %c0_20 = arith.constant 0 : index
    %c0_21 = arith.constant 0 : index
    %26 = vector.load %arg3[%c2_19, %c0_20, %c0_21] : memref<5x128x256xf32, #tpu.memory_space<vmem>>, vector<1x128x256xf32>
    %27 = vector.shape_cast %26 : vector<1x128x256xf32> to vector<128x256xf32>
    %cst_22 = arith.constant dense<0.000000e+00> : vector<12x256xf32>
    %28 = tpu.matmul %25, %27, %cst_22 {dimension_numbers = #tpu.dot_dimension_numbers<[1], [0], [0], [1], [0, 0, 1, 1], [], []>} : vector<12x128xf32>, vector<128x256xf32>, vector<12x256xf32> -> vector<12x256xf32>
    %29 = arith.addf %24, %28 : vector<12x256xf32>
    %c18 = arith.constant 18 : index
    %c0_23 = arith.constant 0 : index
    %30 = vector.load %arg10[%c18, %c0_23] : memref<32x128xf32, #tpu.memory_space<vmem>>, vector<12x128xf32>
    %c3 = arith.constant 3 : index
    %c0_24 = arith.constant 0 : index
    %c0_25 = arith.constant 0 : index
    %31 = vector.load %arg3[%c3, %c0_24, %c0_25] : memref<5x128x256xf32, #tpu.memory_space<vmem>>, vector<1x128x256xf32>
    %32 = vector.shape_cast %31 : vector<1x128x256xf32> to vector<128x256xf32>
    %cst_26 = arith.constant dense<0.000000e+00> : vector<12x256xf32>
    %33 = tpu.matmul %30, %32, %cst_26 {dimension_numbers = #tpu.dot_dimension_numbers<[1], [0], [0], [1], [0, 0, 1, 1], [], []>} : vector<12x128xf32>, vector<128x256xf32>, vector<12x256xf32> -> vector<12x256xf32>
    %34 = arith.addf %29, %33 : vector<12x256xf32>
    %c4 = arith.constant 4 : index
    %c0_27 = arith.constant 0 : index
    %35 = vector.load %arg10[%c4, %c0_27] : memref<32x128xf32, #tpu.memory_space<vmem>>, vector<12x128xf32>
    %c4_28 = arith.constant 4 : index
    %c0_29 = arith.constant 0 : index
    %c0_30 = arith.constant 0 : index
    %36 = vector.load %arg3[%c4_28, %c0_29, %c0_30] : memref<5x128x256xf32, #tpu.memory_space<vmem>>, vector<1x128x256xf32>
    %37 = vector.shape_cast %36 : vector<1x128x256xf32> to vector<128x256xf32>
    %cst_31 = arith.constant dense<0.000000e+00> : vector<12x256xf32>
    %38 = tpu.matmul %35, %37, %cst_31 {dimension_numbers = #tpu.dot_dimension_numbers<[1], [0], [0], [1], [0, 0, 1, 1], [], []>} : vector<12x128xf32>, vector<128x256xf32>, vector<12x256xf32> -> vector<12x256xf32>
    %39 = arith.addf %34, %38 : vector<12x256xf32>
    %c16_32 = arith.constant 16 : index
    %c0_33 = arith.constant 0 : index
    %40 = vector.load %arg10[%c16_32, %c0_33] : memref<32x128xf32, #tpu.memory_space<vmem>>, vector<12x128xf32>
    %c0_34 = arith.constant 0 : index
    %c0_35 = arith.constant 0 : index
    %c0_36 = arith.constant 0 : index
    %41 = vector.load %arg3[%c0_34, %c0_35, %c0_36] : memref<5x128x256xf32, #tpu.memory_space<vmem>>, vector<1x128x256xf32>
    %42 = vector.shape_cast %41 : vector<1x128x256xf32> to vector<128x256xf32>
    %cst_37 = arith.constant dense<0.000000e+00> : vector<12x256xf32>
    %43 = tpu.matmul %40, %42, %cst_37 {dimension_numbers = #tpu.dot_dimension_numbers<[1], [0], [0], [1], [0, 0, 1, 1], [], []>} : vector<12x128xf32>, vector<128x256xf32>, vector<12x256xf32> -> vector<12x256xf32>
    %c2_38 = arith.constant 2 : index
    %c0_39 = arith.constant 0 : index
    %44 = vector.load %arg10[%c2_38, %c0_39] : memref<32x128xf32, #tpu.memory_space<vmem>>, vector<12x128xf32>
    %c1_40 = arith.constant 1 : index
    %c0_41 = arith.constant 0 : index
    %c0_42 = arith.constant 0 : index
    %45 = vector.load %arg3[%c1_40, %c0_41, %c0_42] : memref<5x128x256xf32, #tpu.memory_space<vmem>>, vector<1x128x256xf32>
    %46 = vector.shape_cast %45 : vector<1x128x256xf32> to vector<128x256xf32>
    %cst_43 = arith.constant dense<0.000000e+00> : vector<12x256xf32>
    %47 = tpu.matmul %44, %46, %cst_43 {dimension_numbers = #tpu.dot_dimension_numbers<[1], [0], [0], [1], [0, 0, 1, 1], [], []>} : vector<12x128xf32>, vector<128x256xf32>, vector<12x256xf32> -> vector<12x256xf32>
    %48 = arith.addf %43, %47 : vector<12x256xf32>
    %c18_44 = arith.constant 18 : index
    %c0_45 = arith.constant 0 : index
    %49 = vector.load %arg10[%c18_44, %c0_45] : memref<32x128xf32, #tpu.memory_space<vmem>>, vector<12x128xf32>
    %c2_46 = arith.constant 2 : index
    %c0_47 = arith.constant 0 : index
    %c0_48 = arith.constant 0 : index
    %50 = vector.load %arg3[%c2_46, %c0_47, %c0_48] : memref<5x128x256xf32, #tpu.memory_space<vmem>>, vector<1x128x256xf32>
    %51 = vector.shape_cast %50 : vector<1x128x256xf32> to vector<128x256xf32>
    %cst_49 = arith.constant dense<0.000000e+00> : vector<12x256xf32>
    %52 = tpu.matmul %49, %51, %cst_49 {dimension_numbers = #tpu.dot_dimension_numbers<[1], [0], [0], [1], [0, 0, 1, 1], [], []>} : vector<12x128xf32>, vector<128x256xf32>, vector<12x256xf32> -> vector<12x256xf32>
    %53 = arith.addf %48, %52 : vector<12x256xf32>
    %c4_50 = arith.constant 4 : index
    %c0_51 = arith.constant 0 : index
    %54 = vector.load %arg10[%c4_50, %c0_51] : memref<32x128xf32, #tpu.memory_space<vmem>>, vector<12x128xf32>
    %c3_52 = arith.constant 3 : index
    %c0_53 = arith.constant 0 : index
    %c0_54 = arith.constant 0 : index
    %55 = vector.load %arg3[%c3_52, %c0_53, %c0_54] : memref<5x128x256xf32, #tpu.memory_space<vmem>>, vector<1x128x256xf32>
    %56 = vector.shape_cast %55 : vector<1x128x256xf32> to vector<128x256xf32>
    %cst_55 = arith.constant dense<0.000000e+00> : vector<12x256xf32>
    %57 = tpu.matmul %54, %56, %cst_55 {dimension_numbers = #tpu.dot_dimension_numbers<[1], [0], [0], [1], [0, 0, 1, 1], [], []>} : vector<12x128xf32>, vector<128x256xf32>, vector<12x256xf32> -> vector<12x256xf32>
    %58 = arith.addf %53, %57 : vector<12x256xf32>
    %c20 = arith.constant 20 : index
    %c0_56 = arith.constant 0 : index
    %59 = vector.load %arg10[%c20, %c0_56] : memref<32x128xf32, #tpu.memory_space<vmem>>, vector<12x128xf32>
    %c4_57 = arith.constant 4 : index
    %c0_58 = arith.constant 0 : index
    %c0_59 = arith.constant 0 : index
    %60 = vector.load %arg3[%c4_57, %c0_58, %c0_59] : memref<5x128x256xf32, #tpu.memory_space<vmem>>, vector<1x128x256xf32>
    %61 = vector.shape_cast %60 : vector<1x128x256xf32> to vector<128x256xf32>
    %cst_60 = arith.constant dense<0.000000e+00> : vector<12x256xf32>
    %62 = tpu.matmul %59, %61, %cst_60 {dimension_numbers = #tpu.dot_dimension_numbers<[1], [0], [0], [1], [0, 0, 1, 1], [], []>} : vector<12x128xf32>, vector<128x256xf32>, vector<12x256xf32> -> vector<12x256xf32>
    %63 = arith.addf %58, %62 : vector<12x256xf32>
    %64 = vector.extract_strided_slice %39 {offsets = [0, 0], sizes = [12, 128], strides = [1, 1]} : vector<12x256xf32> to vector<12x128xf32>
    %65 = vector.extract_strided_slice %39 {offsets = [0, 128], sizes = [12, 128], strides = [1, 1]} : vector<12x256xf32> to vector<12x128xf32>
    %66 = arith.maximumf %64, %65 : vector<12x128xf32>
    %67 = vector.extract_strided_slice %63 {offsets = [0, 0], sizes = [12, 128], strides = [1, 1]} : vector<12x256xf32> to vector<12x128xf32>
    %68 = vector.extract_strided_slice %63 {offsets = [0, 128], sizes = [12, 128], strides = [1, 1]} : vector<12x256xf32> to vector<12x128xf32>
    %69 = arith.maximumf %67, %68 : vector<12x128xf32>
    %70 = arith.maximumf %66, %69 : vector<12x128xf32>
    %c0_61 = arith.constant 0 : index
    %c0_62 = arith.constant 0 : index
    %71 = vector.load %arg4[%c0_61, %c0_62] : memref<1x128xf32, #tpu.memory_space<vmem>>, vector<1x128xf32>
    %72 = vector.broadcast %71 : vector<1x128xf32> to vector<12x128xf32>
    %73 = arith.addf %70, %72 : vector<12x128xf32>
    %cst_63 = arith.constant 0.000000e+00 : f32
    %74 = vector.broadcast %cst_63 : f32 to vector<12x128xf32>
    %75 = arith.maximumf %73, %74 : vector<12x128xf32>
    %c0_64 = arith.constant 0 : index
    %c0_65 = arith.constant 0 : index
    %76 = vector.load %arg11[%c0_64, %c0_65] : memref<12x128xf32, #tpu.memory_space<vmem>>, vector<12x128xf32>
    tpu.vector_store %arg11[%c0_64, %c0_65], %75 {strides = array<i32>} : memref<12x128xf32, #tpu.memory_space<vmem>>, vector<12x128xf32>,
    %c0_66 = arith.constant 0 : index
    %c0_67 = arith.constant 0 : index
    %77 = vector.load %arg11[%c0_66, %c0_67] : memref<12x128xf32, #tpu.memory_space<vmem>>, vector<2x128xf32>
    %c0_68 = arith.constant 0 : index
    %c0_69 = arith.constant 0 : index
    %c0_70 = arith.constant 0 : index
    %78 = vector.load %arg5[%c0_68, %c0_69, %c0_70] : memref<6x128x128xf32, #tpu.memory_space<vmem>>, vector<1x128x128xf32>
    %79 = vector.shape_cast %78 : vector<1x128x128xf32> to vector<128x128xf32>
    %cst_71 = arith.constant dense<0.000000e+00> : vector<2x128xf32>
    %80 = tpu.matmul %77, %79, %cst_71 {dimension_numbers = #tpu.dot_dimension_numbers<[1], [0], [0], [1], [0, 0, 1, 1], [], []>} : vector<2x128xf32>, vector<128x128xf32>, vector<2x128xf32> -> vector<2x128xf32>
    %c2_72 = arith.constant 2 : index
    %c0_73 = arith.constant 0 : index
    %81 = vector.load %arg11[%c2_72, %c0_73] : memref<12x128xf32, #tpu.memory_space<vmem>>, vector<2x128xf32>
    %c1_74 = arith.constant 1 : index
    %c0_75 = arith.constant 0 : index
    %c0_76 = arith.constant 0 : index
    %82 = vector.load %arg5[%c1_74, %c0_75, %c0_76] : memref<6x128x128xf32, #tpu.memory_space<vmem>>, vector<1x128x128xf32>
    %83 = vector.shape_cast %82 : vector<1x128x128xf32> to vector<128x128xf32>
    %cst_77 = arith.constant dense<0.000000e+00> : vector<2x128xf32>
    %84 = tpu.matmul %81, %83, %cst_77 {dimension_numbers = #tpu.dot_dimension_numbers<[1], [0], [0], [1], [0, 0, 1, 1], [], []>} : vector<2x128xf32>, vector<128x128xf32>, vector<2x128xf32> -> vector<2x128xf32>
    %85 = arith.addf %80, %84 : vector<2x128xf32>
    %c4_78 = arith.constant 4 : index
    %c0_79 = arith.constant 0 : index
    %86 = vector.load %arg11[%c4_78, %c0_79] : memref<12x128xf32, #tpu.memory_space<vmem>>, vector<2x128xf32>
    %c2_80 = arith.constant 2 : index
    %c0_81 = arith.constant 0 : index
    %c0_82 = arith.constant 0 : index
    %87 = vector.load %arg5[%c2_80, %c0_81, %c0_82] : memref<6x128x128xf32, #tpu.memory_space<vmem>>, vector<1x128x128xf32>
    %88 = vector.shape_cast %87 : vector<1x128x128xf32> to vector<128x128xf32>
    %cst_83 = arith.constant dense<0.000000e+00> : vector<2x128xf32>
    %89 = tpu.matmul %86, %88, %cst_83 {dimension_numbers = #tpu.dot_dimension_numbers<[1], [0], [0], [1], [0, 0, 1, 1], [], []>} : vector<2x128xf32>, vector<128x128xf32>, vector<2x128xf32> -> vector<2x128xf32>
    %90 = arith.addf %85, %89 : vector<2x128xf32>
    %c6 = arith.constant 6 : index
    %c0_84 = arith.constant 0 : index
    %91 = vector.load %arg11[%c6, %c0_84] : memref<12x128xf32, #tpu.memory_space<vmem>>, vector<2x128xf32>
    %c3_85 = arith.constant 3 : index
    %c0_86 = arith.constant 0 : index
    %c0_87 = arith.constant 0 : index
    %92 = vector.load %arg5[%c3_85, %c0_86, %c0_87] : memref<6x128x128xf32, #tpu.memory_space<vmem>>, vector<1x128x128xf32>
    %93 = vector.shape_cast %92 : vector<1x128x128xf32> to vector<128x128xf32>
    %cst_88 = arith.constant dense<0.000000e+00> : vector<2x128xf32>
    %94 = tpu.matmul %91, %93, %cst_88 {dimension_numbers = #tpu.dot_dimension_numbers<[1], [0], [0], [1], [0, 0, 1, 1], [], []>} : vector<2x128xf32>, vector<128x128xf32>, vector<2x128xf32> -> vector<2x128xf32>
    %95 = arith.addf %90, %94 : vector<2x128xf32>
    %c8 = arith.constant 8 : index
    %c0_89 = arith.constant 0 : index
    %96 = vector.load %arg11[%c8, %c0_89] : memref<12x128xf32, #tpu.memory_space<vmem>>, vector<2x128xf32>
    %c4_90 = arith.constant 4 : index
    %c0_91 = arith.constant 0 : index
    %c0_92 = arith.constant 0 : index
    %97 = vector.load %arg5[%c4_90, %c0_91, %c0_92] : memref<6x128x128xf32, #tpu.memory_space<vmem>>, vector<1x128x128xf32>
    %98 = vector.shape_cast %97 : vector<1x128x128xf32> to vector<128x128xf32>
    %cst_93 = arith.constant dense<0.000000e+00> : vector<2x128xf32>
    %99 = tpu.matmul %96, %98, %cst_93 {dimension_numbers = #tpu.dot_dimension_numbers<[1], [0], [0], [1], [0, 0, 1, 1], [], []>} : vector<2x128xf32>, vector<128x128xf32>, vector<2x128xf32> -> vector<2x128xf32>
    %100 = arith.addf %95, %99 : vector<2x128xf32>
    %c10 = arith.constant 10 : index
    %c0_94 = arith.constant 0 : index
    %101 = vector.load %arg11[%c10, %c0_94] : memref<12x128xf32, #tpu.memory_space<vmem>>, vector<2x128xf32>
    %c5 = arith.constant 5 : index
    %c0_95 = arith.constant 0 : index
    %c0_96 = arith.constant 0 : index
    %102 = vector.load %arg5[%c5, %c0_95, %c0_96] : memref<6x128x128xf32, #tpu.memory_space<vmem>>, vector<1x128x128xf32>
    %103 = vector.shape_cast %102 : vector<1x128x128xf32> to vector<128x128xf32>
    %cst_97 = arith.constant dense<0.000000e+00> : vector<2x128xf32>
    %104 = tpu.matmul %101, %103, %cst_97 {dimension_numbers = #tpu.dot_dimension_numbers<[1], [0], [0], [1], [0, 0, 1, 1], [], []>} : vector<2x128xf32>, vector<128x128xf32>, vector<2x128xf32> -> vector<2x128xf32>
    %105 = arith.addf %100, %104 : vector<2x128xf32>
    %c0_98 = arith.constant 0 : index
    %c0_99 = arith.constant 0 : index
    %106 = vector.load %arg6[%c0_98, %c0_99] : memref<1x128xf32, #tpu.memory_space<vmem>>, vector<1x128xf32>
    %107 = vector.broadcast %106 : vector<1x128xf32> to vector<2x128xf32>
    %108 = arith.addf %105, %107 : vector<2x128xf32>
    %cst_100 = arith.constant 0.000000e+00 : f32
    %109 = vector.broadcast %cst_100 : f32 to vector<2x128xf32>
    %110 = arith.maximumf %108, %109 : vector<2x128xf32>
    %c0_101 = arith.constant 0 : index
    %c0_102 = arith.constant 0 : index
    %111 = vector.load %arg7[%c0_101, %c0_102] : memref<128x128xf32, #tpu.memory_space<vmem>>, vector<128x128xf32>
    %cst_103 = arith.constant dense<0.000000e+00> : vector<2x128xf32>
    %112 = tpu.matmul %110, %111, %cst_103 {dimension_numbers = #tpu.dot_dimension_numbers<[1], [0], [0], [1], [0, 0, 1, 1], [], []>} : vector<2x128xf32>, vector<128x128xf32>, vector<2x128xf32> -> vector<2x128xf32>
    %c0_104 = arith.constant 0 : index
    %c0_105 = arith.constant 0 : index
    %113 = vector.load %arg8[%c0_104, %c0_105] : memref<1x128xf32, #tpu.memory_space<vmem>>, vector<1x128xf32>
    %114 = vector.broadcast %113 : vector<1x128xf32> to vector<2x128xf32>
    %115 = arith.addf %112, %114 : vector<2x128xf32>
    %c0_106 = arith.constant 0 : index
    %c0_107 = arith.constant 0 : index
    %116 = vector.load %arg9[%c0_106, %c0_107] : memref<2x128xf32, #tpu.memory_space<vmem>>, vector<2x128xf32>
    tpu.vector_store %arg9[%c0_106, %c0_107], %115 {strides = array<i32>} : memref<2x128xf32, #tpu.memory_space<vmem>>, vector<2x128xf32>,
    return
  }
}

</mosaic_0001>

<llo_original>
// kernel: tile.19
$region0: #{tile.19}
  %s0 = inlined_call_operand.vmem [shape: f32[6,16], index: 0, kind: input, shape index: {}]
  %s1 = inlined_call_operand.vmem [shape: f32[96], index: 1, kind: output, shape index: {}]
  $region1: #{tile.19} parent=0
    #allocation0 [shape = 'u8[4096]{0}', space=vmem, size = 0x1000, scoped, tag = 'scoped mem for output reshape']
    %v2 = vld [vmem:[%s0] sm:$0x1]
    %vm3 = vcmask 130048
    %4 = vst.msk [vmem:[#allocation0] sm:$0x1] %vm3, %v2
    %s5 = scalar_lea.vmem %s0, 5
    %v6 = vld [vmem:[%s5] sm:$0x1]
    %7 = vrot.lane.b32.xlu0 %v6, 80
    %v8 = vpop.permute.xlu0 %7
    %vm9 = vcmask 786048
    %10 = vst.msk [vmem:[#allocation0] sm:$0x1] %vm9, %v8
    %s11 = scalar_lea.vmem %s0, 4
    %v12 = vld [vmem:[%s11] sm:$0x1]
    %13 = vrot.lane.b32.xlu0 %v12, 64
    %v14 = vpop.permute.xlu0 %13
    %vm15 = vcmask 654848
    %16 = vst.msk [vmem:[#allocation0] sm:$0x1] %vm15, %v14
    %s17 = scalar_lea.vmem %s0, 3
    %v18 = vld [vmem:[%s17] sm:$0x1]
    %19 = vrot.lane.b32.xlu0 %v18, 48
    %v20 = vpop.permute.xlu0 %19
    %vm21 = vcmask 523648
    %22 = vst.msk [vmem:[#allocation0] sm:$0x1] %vm21, %v20
    %s23 = scalar_lea.vmem %s0, 2
    %v24 = vld [vmem:[%s23] sm:$0x1]
    %25 = vrot.lane.b32.xlu0 %v24, 32
    %v26 = vpop.permute.xlu0 %25
    %vm27 = vcmask 392448
    %28 = vst.msk [vmem:[#allocation0] sm:$0x1] %vm27, %v26
    %s29 = scalar_lea.vmem %s0, 1
    %v30 = vld [vmem:[%s29] sm:$0x1]
    %31 = vrot.lane.b32.xlu0 %v30, 16
    %v32 = vpop.permute.xlu0 %31
    %vm33 = vcmask 261248
    %34 = vst.msk [vmem:[#allocation0] sm:$0x1] %vm33, %v32
    %s36 = sshllo.u32 0, 1
    %v38 = vld [vmem:[#allocation0] sm:%s36]
    %s39 = sshllo.u32 0, 1
    %40 = vst [vmem:[%s1] sm:%s39] %v38

// kernel: tile.18
$region0: #{tile.18}
  #allocation2 [shape = 's32[1]{0}', space=sflag, size = 0x4, scoped, tag = 'scoped memory for tile.18']
  %s0 = inlined_call_operand.hbm [shape: f32[16], index: 0, kind: input, shape index: {}]
  %s1 = inlined_call_operand.vmem [shape: f32[6,16], index: 1, kind: output, shape index: {}]
  $region1: #{tile.18} parent=0
    #allocation0 [shape = 'u8[512]{0}', space=vmem, size = 0x400, scoped, tag = 'operand span for operand 0']
    #allocation1 [shape = 's32[1]{0}', space=sflag, size = 0x4, scoped, tag = 'scoped memory for tile.18']
    %2 = vsyncpa [#allocation1], 0
    // Predicated region
    $region2: #{tile.18} parent=1 // pred_check
      _
    $region3: #{tile.18} parent=1 // pred_check_branch
      %4 = sbr.rel (0) target = $region5
    $region4: #{tile.18} parent=1 // pred_region
      %s6 = ssub.s32 16, 16
      %7 = vsyncadd [#allocation1], %s6
      %s9 = sshll.u32 [#allocation0], 4
      %s10 = int_to_ptr.vmem [resolvable:$true] %s9
      %12 = dma.hbm_to_vmem [thread:$0]  %s0, 16, %s10, [#allocation1]
    $region5: #{tile.18} parent=1 // pred_fallthru
      _
    // Predicated region
    $region6: #{tile.18} parent=1 // pred_check
      _
    $region7: #{tile.18} parent=1 // pred_check_branch
      %14 = sbr.rel (0) target = $region9
    $region8: #{tile.18} parent=1 // pred_region
      %15 = dma.done [#allocation1], 16
    $region9: #{tile.18} parent=1 // pred_fallthru
      _
    %v16 = vld [vmem:[#allocation0] ss:$0 sm:$0xff]
    %17 = vst [vmem:[%s1] sm:$0xff] %v16
    %18 = vsyncpa [#allocation1], 1

// kernel: tile.13
$region0: #{tile.13}
  #allocation2 [shape = 's32[1]{0}', space=sflag, size = 0x4, scoped, tag = 'scoped memory for tile.13']
  %s0 = inlined_call_operand.hbm [shape: f32[6], index: 0, kind: input, shape index: {}]
  %s1 = inlined_call_operand.vmem [shape: f32[16,6], index: 1, kind: output, shape index: {}]
  $region1: #{tile.13} parent=0
    #allocation0 [shape = 'u8[512]{0}', space=vmem, size = 0x400, scoped, tag = 'operand span for operand 0']
    #allocation1 [shape = 's32[1]{0}', space=sflag, size = 0x4, scoped, tag = 'scoped memory for tile.13']
    %2 = vsyncpa [#allocation1], 0
    // Predicated region
    $region2: #{tile.13} parent=1 // pred_check
      _
    $region3: #{tile.13} parent=1 // pred_check_branch
      %4 = sbr.rel (0) target = $region5
    $region4: #{tile.13} parent=1 // pred_region
      %s6 = ssub.s32 16, 16
      %7 = vsyncadd [#allocation1], %s6
      %s9 = sshll.u32 [#allocation0], 4
      %s10 = int_to_ptr.vmem [resolvable:$true] %s9
      %12 = dma.hbm_to_vmem [thread:$0]  %s0, 16, %s10, [#allocation1]
    $region5: #{tile.13} parent=1 // pred_fallthru
      _
    // Predicated region
    $region6: #{tile.13} parent=1 // pred_check
      _
    $region7: #{tile.13} parent=1 // pred_check_branch
      %14 = sbr.rel (0) target = $region9
    $region8: #{tile.13} parent=1 // pred_region
      %15 = dma.done [#allocation1], 16
    $region9: #{tile.13} parent=1 // pred_fallthru
      _
    %v16 = vld [vmem:[#allocation0] ss:$0 sm:$0xff]
    %17 = vst [vmem:[%s1] sm:$0xff] %v16
    %s18 = scalar_lea.vmem %s1, 8
    %19 = vst [vmem:[%s18] sm:$0xff] %v16
    %20 = vsyncpa [#allocation1], 1

// kernel: tile.14
$region0: #{tile.14}
  %s0 = inlined_call_operand.vmem [shape: f32[16,6], index: 0, kind: input, shape index: {}]
  %s1 = inlined_call_operand.vmem [shape: f32[96], index: 1, kind: output, shape index: {}]
  $region1: #{tile.14} parent=0
    #allocation0 [shape = 'u8[4096]{0}', space=vmem, size = 0x1000, scoped, tag = 'scoped mem for output reshape']
    %v2 = vld [vmem:[%s0] sm:$0x1]
    %vm3 = vcmask 48128
    %4 = vst.msk [vmem:[#allocation0] sm:$0x1] %vm3, %v2
    %s5 = scalar_lea.vmem %s0, 15
    %v6 = vld [vmem:[%s5] sm:$0x1]
    %7 = vrot.lane.b32.xlu0 %v6, 90
    %v8 = vpop.permute.xlu0 %7
    %vm9 = vcmask 786128
    %10 = vst.msk [vmem:[#allocation0] sm:$0x1] %vm9, %v8
    %s11 = scalar_lea.vmem %s0, 14
    %v12 = vld [vmem:[%s11] sm:$0x1]
    %13 = vrot.lane.b32.xlu0 %v12, 84
    %v14 = vpop.permute.xlu0 %13
    %vm15 = vcmask 736928
    %16 = vst.msk [vmem:[#allocation0] sm:$0x1] %vm15, %v14
    %s17 = scalar_lea.vmem %s0, 13
    %v18 = vld [vmem:[%s17] sm:$0x1]
    %19 = vrot.lane.b32.xlu0 %v18, 78
    %v20 = vpop.permute.xlu0 %19
    %vm21 = vcmask 687728
    %22 = vst.msk [vmem:[#allocation0] sm:$0x1] %vm21, %v20
    %s23 = scalar_lea.vmem %s0, 12
    %v24 = vld [vmem:[%s23] sm:$0x1]
    %25 = vrot.lane.b32.xlu0 %v24, 72
    %v26 = vpop.permute.xlu0 %25
    %vm27 = vcmask 638528
    %28 = vst.msk [vmem:[#allocation0] sm:$0x1] %vm27, %v26
    %s29 = scalar_lea.vmem %s0, 11
    %v30 = vld [vmem:[%s29] sm:$0x1]
    %31 = vrot.lane.b32.xlu0 %v30, 66
    %v32 = vpop.permute.xlu0 %31
    %vm33 = vcmask 589328
    %34 = vst.msk [vmem:[#allocation0] sm:$0x1] %vm33, %v32
    %s35 = scalar_lea.vmem %s0, 10
    %v36 = vld [vmem:[%s35] sm:$0x1]
    %37 = vrot.lane.b32.xlu0 %v36, 60
    %v38 = vpop.permute.xlu0 %37
    %vm39 = vcmask 540128
    %40 = vst.msk [vmem:[#allocation0] sm:$0x1] %vm39, %v38
    %s41 = scalar_lea.vmem %s0, 9
    %v42 = vld [vmem:[%s41] sm:$0x1]
    %43 = vrot.lane.b32.xlu0 %v42, 54
    %v44 = vpop.permute.xlu0 %43
    %vm45 = vcmask 490928
    %46 = vst.msk [vmem:[#allocation0] sm:$0x1] %vm45, %v44
    %s47 = scalar_lea.vmem %s0, 8
    %v48 = vld [vmem:[%s47] sm:$0x1]
    %49 = vrot.lane.b32.xlu0 %v48, 48
    %v50 = vpop.permute.xlu0 %49
    %vm51 = vcmask 441728
    %52 = vst.msk [vmem:[#allocation0] sm:$0x1] %vm51, %v50
    %s53 = scalar_lea.vmem %s0, 7
    %v54 = vld [vmem:[%s53] sm:$0x1]
    %55 = vrot.lane.b32.xlu0 %v54, 42
    %v56 = vpop.permute.xlu0 %55
    %vm57 = vcmask 392528
    %58 = vst.msk [vmem:[#allocation0] sm:$0x1] %vm57, %v56
    %s59 = scalar_lea.vmem %s0, 6
    %v60 = vld [vmem:[%s59] sm:$0x1]
    %61 = vrot.lane.b32.xlu0 %v60, 36
    %v62 = vpop.permute.xlu0 %61
    %vm63 = vcmask 343328
    %64 = vst.msk [vmem:[#allocation0] sm:$0x1] %vm63, %v62
    %s65 = scalar_lea.vmem %s0, 5
    %v66 = vld [vmem:[%s65] sm:$0x1]
    %67 = vrot.lane.b32.xlu0 %v66, 30
    %v68 = vpop.permute.xlu0 %67
    %vm69 = vcmask 294128
    %70 = vst.msk [vmem:[#allocation0] sm:$0x1] %vm69, %v68
    %s71 = scalar_lea.vmem %s0, 4
    %v72 = vld [vmem:[%s71] sm:$0x1]
    %73 = vrot.lane.b32.xlu0 %v72, 24
    %v74 = vpop.permute.xlu0 %73
    %vm75 = vcmask 244928
    %76 = vst.msk [vmem:[#allocation0] sm:$0x1] %vm75, %v74
    %s77 = scalar_lea.vmem %s0, 3
    %v78 = vld [vmem:[%s77] sm:$0x1]
    %79 = vrot.lane.b32.xlu0 %v78, 18
    %v80 = vpop.permute.xlu0 %79
    %vm81 = vcmask 195728
    %82 = vst.msk [vmem:[#allocation0] sm:$0x1] %vm81, %v80
    %s83 = scalar_lea.vmem %s0, 2
    %v84 = vld [vmem:[%s83] sm:$0x1]
    %85 = vrot.lane.b32.xlu0 %v84, 12
    %v86 = vpop.permute.xlu0 %85
    %vm87 = vcmask 146528
    %88 = vst.msk [vmem:[#allocation0] sm:$0x1] %vm87, %v86
    %s89 = scalar_lea.vmem %s0, 1
    %v90 = vld [vmem:[%s89] sm:$0x1]
    %91 = vrot.lane.b32.xlu0 %v90, 6
    %v92 = vpop.permute.xlu0 %91
    %vm93 = vcmask 97328
    %94 = vst.msk [vmem:[#allocation0] sm:$0x1] %vm93, %v92
    %s96 = sshllo.u32 0, 1
    %v98 = vld [vmem:[#allocation0] sm:%s96]
    %s99 = sshllo.u32 0, 1
    %100 = vst [vmem:[%s1] sm:%s99] %v98

// kernel: basenet_v2_forward.1
$region0: #{basenet_v2_forward.1}
  #allocation0 [shape = 'u32[]', space=smem, size = 0x4, offset = 0x4, fixed_abs, tag = 'smem constant byte address 0x4 - core index']
  #allocation1 [shape = 'u32[144,128]{1,0:T(1,128)}', space=vmem, size = 0x12000, scoped, tag = 'internal scratch']
  #allocation2 [shape = 'f32[32,128]{1,0:T(8,128)}', space=vmem, size = 0x4000, scoped, tag = 'scratch operand']
  #allocation3 [shape = 'f32[12,128]{1,0:T(8,128)}', space=vmem, size = 0x2000, scoped, tag = 'scratch operand']
  %s0 = inlined_call_operand.vmem [shape: f32[128,512], index: 0, kind: input, shape index: {}]
  %s1 = inlined_call_operand.vmem [shape: f32[512,128], index: 1, kind: input, shape index: {}]
  %s2 = inlined_call_operand.vmem [shape: f32[1,128], index: 2, kind: input, shape index: {}]
  %s3 = inlined_call_operand.vmem [shape: f32[5,128,256], index: 3, kind: input, shape index: {}]
  %s4 = inlined_call_operand.vmem [shape: f32[1,128], index: 4, kind: input, shape index: {}]
  %s5 = inlined_call_operand.vmem [shape: f32[6,128,128], index: 5, kind: input, shape index: {}]
  %s6 = inlined_call_operand.vmem [shape: f32[1,128], index: 6, kind: input, shape index: {}]
  %s7 = inlined_call_operand.vmem [shape: f32[128,128], index: 7, kind: input, shape index: {}]
  %s8 = inlined_call_operand.vmem [shape: f32[1,128], index: 8, kind: input, shape index: {}]
  %s9 = inlined_call_operand.hbm [shape: f32[2,128], index: 9, kind: output, shape index: {}]
  %s10 = sld [smem:[#allocation0]]
  $region46: #{basenet_v2_forward.1} parent=0
    _
  %s12 = ssub.s32 1, %s10
  %s13 = scalar_select 0, %s12, %s10
  $region1: #{basenet_v2_forward.1} parent=0
    #allocation4 [shape = 'u8[1024]{0}', space=vmem, size = 0x400, scoped, tag = 'output window, operand 0, single buffered']
    #allocation5 [shape = 's32[1]{0}', space=sflag, size = 0x4, scoped, tag = 'scoped memory for basenet_v2_forward.1']
    %14 = vsyncpa [#allocation5], 0
    // Predicated region
    $region2: #{basenet_v2_forward.1} parent=1 // pred_check
      _
    $region3: #{basenet_v2_forward.1} parent=1 // pred_check_branch
      %16 = sbr.rel (0) target = $region5
    $region4: #{basenet_v2_forward.1} parent=1 // pred_region
      _
    $region5: #{basenet_v2_forward.1} parent=1 // pred_fallthru
      _
    // Predicated region
    $region6: #{basenet_v2_forward.1} parent=1 // pred_check
      _
    $region7: #{basenet_v2_forward.1} parent=1 // pred_check_branch
      %18 = sbr.rel (0) target = $region9
    $region8: #{basenet_v2_forward.1} parent=1 // pred_region
      _
    $region9: #{basenet_v2_forward.1} parent=1 // pred_fallthru
      _
    // Predicated region
    $region10: #{basenet_v2_forward.1} parent=1 // pred_check
      _
    $region11: #{basenet_v2_forward.1} parent=1 // pred_check_branch
      %20 = sbr.rel (0) target = $region13
    $region12: #{basenet_v2_forward.1} parent=1 // pred_region
      _
    $region13: #{basenet_v2_forward.1} parent=1 // pred_fallthru
      _
    // Predicated region
    $region14: #{basenet_v2_forward.1} parent=1 // pred_check
      _
    $region15: #{basenet_v2_forward.1} parent=1 // pred_check_branch
      %22 = sbr.rel (0) target = $region17
    $region16: #{basenet_v2_forward.1} parent=1 // pred_region
      _
    $region17: #{basenet_v2_forward.1} parent=1 // pred_fallthru
      _
    // Predicated region
    $region18: #{basenet_v2_forward.1} parent=1 // pred_check
      _
    $region19: #{basenet_v2_forward.1} parent=1 // pred_check_branch
      %24 = sbr.rel (0) target = $region21
    $region20: #{basenet_v2_forward.1} parent=1 // pred_region
      _
    $region21: #{basenet_v2_forward.1} parent=1 // pred_fallthru
      _
    // Predicated region
    $region22: #{basenet_v2_forward.1} parent=1 // pred_check
      _
    $region23: #{basenet_v2_forward.1} parent=1 // pred_check_branch
      %26 = sbr.rel (0) target = $region25
    $region24: #{basenet_v2_forward.1} parent=1 // pred_region
      _
    $region25: #{basenet_v2_forward.1} parent=1 // pred_fallthru
      _
    // Predicated region
    $region26: #{basenet_v2_forward.1} parent=1 // pred_check
      _
    $region27: #{basenet_v2_forward.1} parent=1 // pred_check_branch
      %28 = sbr.rel (0) target = $region29
    $region28: #{basenet_v2_forward.1} parent=1 // pred_region
      _
    $region29: #{basenet_v2_forward.1} parent=1 // pred_fallthru
      _
    // Predicated region
    $region30: #{basenet_v2_forward.1} parent=1 // pred_check
      _
    $region31: #{basenet_v2_forward.1} parent=1 // pred_check_branch
      %30 = sbr.rel (0) target = $region33
    $region32: #{basenet_v2_forward.1} parent=1 // pred_region
      _
    $region33: #{basenet_v2_forward.1} parent=1 // pred_fallthru
      _
    // Predicated region
    $region34: #{basenet_v2_forward.1} parent=1 // pred_check
      _
    $region35: #{basenet_v2_forward.1} parent=1 // pred_check_branch
      %32 = sbr.rel (0) target = $region37
    $region36: #{basenet_v2_forward.1} parent=1 // pred_region
      _
    $region37: #{basenet_v2_forward.1} parent=1 // pred_fallthru
      _
    %v33 = vld [vmem:[%s0] sm:$0xff]
    %v34 = vld [vmem:[%s0 + $0x8] sm:$0xff]
    %v35 = vld [vmem:[%s0 + $0x10] sm:$0xff]
    %v36 = vld [vmem:[%s0 + $0x18] sm:$0xff]
    %v37 = vld [vmem:[%s0 + $0x20] sm:$0xff]
    %v38 = vld [vmem:[%s0 + $0x28] sm:$0xff]
    %v39 = vld [vmem:[%s0 + $0x30] sm:$0xff]
    %v40 = vld [vmem:[%s0 + $0x38] sm:$0xff]
    %v41 = vld [vmem:[%s0 + $0x40] sm:$0xff]
    %v42 = vld [vmem:[%s0 + $0x48] sm:$0xff]
    %v43 = vld [vmem:[%s0 + $0x50] sm:$0xff]
    %v44 = vld [vmem:[%s0 + $0x58] sm:$0xff]
    %v45 = vld [vmem:[%s0 + $0x60] sm:$0xff]
    %v46 = vld [vmem:[%s0 + $0x68] sm:$0xff]
    %v47 = vld [vmem:[%s0 + $0x70] sm:$0xff]
    %v48 = vld [vmem:[%s0 + $0x78] sm:$0xff]
    %v49 = vld [vmem:[%s0 + $0x80] sm:$0xff]
    %v50 = vld [vmem:[%s0 + $0x88] sm:$0xff]
    %v51 = vld [vmem:[%s0 + $0x90] sm:$0xff]
    %v52 = vld [vmem:[%s0 + $0x98] sm:$0xff]
    %v53 = vld [vmem:[%s0 + $0xa0] sm:$0xff]
    %v54 = vld [vmem:[%s0 + $0xa8] sm:$0xff]
    %v55 = vld [vmem:[%s0 + $0xb0] sm:$0xff]
    %v56 = vld [vmem:[%s0 + $0xb8] sm:$0xff]
    %v57 = vld [vmem:[%s0 + $0xc0] sm:$0xff]
    %v58 = vld [vmem:[%s0 + $0xc8] sm:$0xff]
    %v59 = vld [vmem:[%s0 + $0xd0] sm:$0xff]
    %v60 = vld [vmem:[%s0 + $0xd8] sm:$0xff]
    %v61 = vld [vmem:[%s0 + $0xe0] sm:$0xff]
    %v62 = vld [vmem:[%s0 + $0xe8] sm:$0xff]
    %v63 = vld [vmem:[%s0 + $0xf0] sm:$0xff]
    %v64 = vld [vmem:[%s0 + $0xf8] sm:$0xff]
    %v65 = vld [vmem:[%s0 + $0x100] sm:$0xff]
    %v66 = vld [vmem:[%s0 + $0x108] sm:$0xff]
    %v67 = vld [vmem:[%s0 + $0x110] sm:$0xff]
    %v68 = vld [vmem:[%s0 + $0x118] sm:$0xff]
    %v69 = vld [vmem:[%s0 + $0x120] sm:$0xff]
    %v70 = vld [vmem:[%s0 + $0x128] sm:$0xff]
    %v71 = vld [vmem:[%s0 + $0x130] sm:$0xff]
    %v72 = vld [vmem:[%s0 + $0x138] sm:$0xff]
    %v73 = vld [vmem:[%s0 + $0x140] sm:$0xff]
    %v74 = vld [vmem:[%s0 + $0x148] sm:$0xff]
    %v75 = vld [vmem:[%s0 + $0x150] sm:$0xff]
    %v76 = vld [vmem:[%s0 + $0x158] sm:$0xff]
    %v77 = vld [vmem:[%s0 + $0x160] sm:$0xff]
    %v78 = vld [vmem:[%s0 + $0x168] sm:$0xff]
    %v79 = vld [vmem:[%s0 + $0x170] sm:$0xff]
    %v80 = vld [vmem:[%s0 + $0x178] sm:$0xff]
    %v81 = vld [vmem:[%s0 + $0x180] sm:$0xff]
    %v82 = vld [vmem:[%s0 + $0x188] sm:$0xff]
    %v83 = vld [vmem:[%s0 + $0x190] sm:$0xff]
    %v84 = vld [vmem:[%s0 + $0x198] sm:$0xff]
    %v85 = vld [vmem:[%s0 + $0x1a0] sm:$0xff]
    %v86 = vld [vmem:[%s0 + $0x1a8] sm:$0xff]
    %v87 = vld [vmem:[%s0 + $0x1b0] sm:$0xff]
    %v88 = vld [vmem:[%s0 + $0x1b8] sm:$0xff]
    %v89 = vld [vmem:[%s0 + $0x1c0] sm:$0xff]
    %v90 = vld [vmem:[%s0 + $0x1c8] sm:$0xff]
    %v91 = vld [vmem:[%s0 + $0x1d0] sm:$0xff]
    %v92 = vld [vmem:[%s0 + $0x1d8] sm:$0xff]
    %v93 = vld [vmem:[%s0 + $0x1e0] sm:$0xff]
    %v94 = vld [vmem:[%s0 + $0x1e8] sm:$0xff]
    %v95 = vld [vmem:[%s0 + $0x1f0] sm:$0xff]
    %v96 = vld [vmem:[%s0 + $0x1f8] sm:$0xff]
    %v97 = vld [vmem:[%s1] sm:$0xff]
    %v98 = vld [vmem:[%s1 + $0x8] sm:$0xff]
    %v99 = vld [vmem:[%s1 + $0x10] sm:$0xff]
    %v100 = vld [vmem:[%s1 + $0x18] sm:$0xff]
    %v101 = vld [vmem:[%s1 + $0x20] sm:$0xff]
    %v102 = vld [vmem:[%s1 + $0x28] sm:$0xff]
    %v103 = vld [vmem:[%s1 + $0x30] sm:$0xff]
    %v104 = vld [vmem:[%s1 + $0x38] sm:$0xff]
    %v105 = vld [vmem:[%s1 + $0x40] sm:$0xff]
    %v106 = vld [vmem:[%s1 + $0x48] sm:$0xff]
    %v107 = vld [vmem:[%s1 + $0x50] sm:$0xff]
    %v108 = vld [vmem:[%s1 + $0x58] sm:$0xff]
    %v109 = vld [vmem:[%s1 + $0x60] sm:$0xff]
    %v110 = vld [vmem:[%s1 + $0x68] sm:$0xff]
    %v111 = vld [vmem:[%s1 + $0x70] sm:$0xff]
    %v112 = vld [vmem:[%s1 + $0x78] sm:$0xff]
    %v113 = vld [vmem:[%s1 + $0x80] sm:$0xff]
    %v114 = vld [vmem:[%s1 + $0x88] sm:$0xff]
    %v115 = vld [vmem:[%s1 + $0x90] sm:$0xff]
    %v116 = vld [vmem:[%s1 + $0x98] sm:$0xff]
    %v117 = vld [vmem:[%s1 + $0xa0] sm:$0xff]
    %v118 = vld [vmem:[%s1 + $0xa8] sm:$0xff]
    %v119 = vld [vmem:[%s1 + $0xb0] sm:$0xff]
    %v120 = vld [vmem:[%s1 + $0xb8] sm:$0xff]
    %v121 = vld [vmem:[%s1 + $0xc0] sm:$0xff]
    %v122 = vld [vmem:[%s1 + $0xc8] sm:$0xff]
    %v123 = vld [vmem:[%s1 + $0xd0] sm:$0xff]
    %v124 = vld [vmem:[%s1 + $0xd8] sm:$0xff]
    %v125 = vld [vmem:[%s1 + $0xe0] sm:$0xff]
    %v126 = vld [vmem:[%s1 + $0xe8] sm:$0xff]
    %v127 = vld [vmem:[%s1 + $0xf0] sm:$0xff]
    %v128 = vld [vmem:[%s1 + $0xf8] sm:$0xff]
    %v129 = vld [vmem:[%s1 + $0x100] sm:$0xff]
    %v130 = vld [vmem:[%s1 + $0x108] sm:$0xff]
    %v131 = vld [vmem:[%s1 + $0x110] sm:$0xff]
    %v132 = vld [vmem:[%s1 + $0x118] sm:$0xff]
    %v133 = vld [vmem:[%s1 + $0x120] sm:$0xff]
    %v134 = vld [vmem:[%s1 + $0x128] sm:$0xff]
    %v135 = vld [vmem:[%s1 + $0x130] sm:$0xff]
    %v136 = vld [vmem:[%s1 + $0x138] sm:$0xff]
    %v137 = vld [vmem:[%s1 + $0x140] sm:$0xff]
    %v138 = vld [vmem:[%s1 + $0x148] sm:$0xff]
    %v139 = vld [vmem:[%s1 + $0x150] sm:$0xff]
    %v140 = vld [vmem:[%s1 + $0x158] sm:$0xff]
    %v141 = vld [vmem:[%s1 + $0x160] sm:$0xff]
    %v142 = vld [vmem:[%s1 + $0x168] sm:$0xff]
    %v143 = vld [vmem:[%s1 + $0x170] sm:$0xff]
    %v144 = vld [vmem:[%s1 + $0x178] sm:$0xff]
    %v145 = vld [vmem:[%s1 + $0x180] sm:$0xff]
    %v146 = vld [vmem:[%s1 + $0x188] sm:$0xff]
    %v147 = vld [vmem:[%s1 + $0x190] sm:$0xff]
    %v148 = vld [vmem:[%s1 + $0x198] sm:$0xff]
    %v149 = vld [vmem:[%s1 + $0x1a0] sm:$0xff]
    %v150 = vld [vmem:[%s1 + $0x1a8] sm:$0xff]
    %v151 = vld [vmem:[%s1 + $0x1b0] sm:$0xff]
    %v152 = vld [vmem:[%s1 + $0x1b8] sm:$0xff]
    %v153 = vld [vmem:[%s1 + $0x1c0] sm:$0xff]
    %v154 = vld [vmem:[%s1 + $0x1c8] sm:$0xff]
    %v155 = vld [vmem:[%s1 + $0x1d0] sm:$0xff]
    %v156 = vld [vmem:[%s1 + $0x1d8] sm:$0xff]
    %v157 = vld [vmem:[%s1 + $0x1e0] sm:$0xff]
    %v158 = vld [vmem:[%s1 + $0x1e8] sm:$0xff]
    %v159 = vld [vmem:[%s1 + $0x1f0] sm:$0xff]
    %v160 = vld [vmem:[%s1 + $0x1f8] sm:$0xff]
    %161 = vmatprep.subr.mxu0 0.0
    %162 = vmatpush1.msra.mxu0 %v97
    %163 = vmatprep.subr.mxu0 0.0
    %164 = vmatpush1.msra.mxu0 %v98
    %165 = vmatprep.subr.mxu0 0.0
    %166 = vmatpush1.msra.mxu0 %v99
    %167 = vmatprep.subr.mxu0 0.0
    %168 = vmatpush1.msra.mxu0 %v100
    %169 = vmatprep.subr.mxu0 0.0
    %170 = vmatpush1.msra.mxu0 %v101
    %171 = vmatprep.subr.mxu0 0.0
    %172 = vmatpush1.msra.mxu0 %v102
    %173 = vmatprep.subr.mxu0 0.0
    %174 = vmatpush1.msra.mxu0 %v103
    %175 = vmatprep.subr.mxu0 0.0
    %176 = vmatpush1.msra.mxu0 %v104
    %177 = vmatprep.subr.mxu0 0.0
    %178 = vmatpush1.msra.mxu0 %v105
    %179 = vmatprep.subr.mxu0 0.0
    %180 = vmatpush1.msra.mxu0 %v106
    %181 = vmatprep.subr.mxu0 0.0
    %182 = vmatpush1.msra.mxu0 %v107
    %183 = vmatprep.subr.mxu0 0.0
    %184 = vmatpush1.msra.mxu0 %v108
    %185 = vmatprep.subr.mxu0 0.0
    %186 = vmatpush1.msra.mxu0 %v109
    %187 = vmatprep.subr.mxu0 0.0
    %188 = vmatpush1.msra.mxu0 %v110
    %189 = vmatprep.subr.mxu0 0.0
    %190 = vmatpush1.msra.mxu0 %v111
    %191 = vmatprep.subr.mxu0 0.0
    %192 = vmatpush1.msra.mxu0 %v112
    %193 = vmatprep.subr.mxu0 0.0
    %194 = vmatpush1.msra.mxu0 %v113
    %195 = vmatprep.subr.mxu0 0.0
    %196 = vmatpush1.msra.mxu0 %v114
    %197 = vmatprep.subr.mxu0 0.0
    %198 = vmatpush1.msra.mxu0 %v115
    %199 = vmatprep.subr.mxu0 0.0
    %200 = vmatpush1.msra.mxu0 %v116
    %201 = vmatprep.subr.mxu0 0.0
    %202 = vmatpush1.msra.mxu0 %v117
    %203 = vmatprep.subr.mxu0 0.0
    %204 = vmatpush1.msra.mxu0 %v118
    %205 = vmatprep.subr.mxu0 0.0
    %206 = vmatpush1.msra.mxu0 %v119
    %207 = vmatprep.subr.mxu0 0.0
    %208 = vmatpush1.msra.mxu0 %v120
    %209 = vmatprep.subr.mxu0 0.0
    %210 = vmatpush1.msra.mxu0 %v121
    %211 = vmatprep.subr.mxu0 0.0
    %212 = vmatpush1.msra.mxu0 %v122
    %213 = vmatprep.subr.mxu0 0.0
    %214 = vmatpush1.msra.mxu0 %v123
    %215 = vmatprep.subr.mxu0 0.0
    %216 = vmatpush1.msra.mxu0 %v124
    %217 = vmatprep.subr.mxu0 0.0
    %218 = vmatpush1.msra.mxu0 %v125
    %219 = vmatprep.subr.mxu0 0.0
    %220 = vmatpush1.msra.mxu0 %v126
    %221 = vmatprep.subr.mxu0 0.0
    %222 = vmatpush1.msra.mxu0 %v127
    %223 = vmatprep.subr.mxu0 0.0
    %224 = vmatpush1.msra.mxu0 %v128
    %225 = vmatprep.mubr.f32.mxu0 %v34
    %226 = vmatmul.mubr.f32.gmra.mrb[0].mxu0 %v33
    %v227 = vpop.f32.mrb[0].mxu0
    %v228 = vadd.f32 0.0, %v227
    %v229 = vpop.f32.mrb[0].mxu0
    %230 = vmatprep.mubr.f32.mxu0 %v38
    %231 = vmatmul.mubr.f32.gmra.mrb[0].mxu0 %v37
    %v232 = vpop.f32.mrb[0].mxu0
    %v233 = vadd.f32 0.0, %v232
    %v234 = vpop.f32.mrb[0].mxu0
    %235 = vmatprep.mubr.f32.mxu0 %v42
    %236 = vmatmul.mubr.f32.gmra.mrb[0].mxu0 %v41
    %v237 = vpop.f32.mrb[0].mxu0
    %v238 = vadd.f32 0.0, %v237
    %v239 = vpop.f32.mrb[0].mxu0
    %240 = vmatprep.mubr.f32.mxu0 %v46
    %241 = vmatmul.mubr.f32.gmra.mrb[0].mxu0 %v45
    %v242 = vpop.f32.mrb[0].mxu0
    %v243 = vadd.f32 0.0, %v242
    %v244 = vpop.f32.mrb[0].mxu0
    %245 = vmatprep.mubr.f32.mxu0 %v50
    %246 = vmatmul.mubr.f32.gmra.mrb[0].mxu0 %v49
    %v247 = vpop.f32.mrb[0].mxu0
    %v248 = vadd.f32 0.0, %v247
    %v249 = vpop.f32.mrb[0].mxu0
    %250 = vmatprep.mubr.f32.mxu0 %v54
    %251 = vmatmul.mubr.f32.gmra.mrb[0].mxu0 %v53
    %v252 = vpop.f32.mrb[0].mxu0
    %v253 = vadd.f32 0.0, %v252
    %v254 = vpop.f32.mrb[0].mxu0
    %255 = vmatprep.mubr.f32.mxu0 %v58
    %256 = vmatmul.mubr.f32.gmra.mrb[0].mxu0 %v57
    %v257 = vpop.f32.mrb[0].mxu0
    %v258 = vadd.f32 0.0, %v257
    %v259 = vpop.f32.mrb[0].mxu0
    %260 = vmatprep.mubr.f32.mxu0 %v62
    %261 = vmatmul.mubr.f32.gmra.mrb[0].mxu0 %v61
    %v262 = vpop.f32.mrb[0].mxu0
    %v263 = vadd.f32 0.0, %v262
    %v264 = vpop.f32.mrb[0].mxu0
    %265 = vmatprep.mubr.f32.mxu0 %v66
    %266 = vmatmul.mubr.f32.gmra.mrb[0].mxu0 %v65
    %v267 = vpop.f32.mrb[0].mxu0
    %v268 = vadd.f32 0.0, %v267
    %v269 = vpop.f32.mrb[0].mxu0
    %270 = vmatprep.mubr.f32.mxu0 %v70
    %271 = vmatmul.mubr.f32.gmra.mrb[0].mxu0 %v69
    %v272 = vpop.f32.mrb[0].mxu0
    %v273 = vadd.f32 0.0, %v272
    %v274 = vpop.f32.mrb[0].mxu0
    %275 = vmatprep.mubr.f32.mxu0 %v74
    %276 = vmatmul.mubr.f32.gmra.mrb[0].mxu0 %v73
    %v277 = vpop.f32.mrb[0].mxu0
    %v278 = vadd.f32 0.0, %v277
    %v279 = vpop.f32.mrb[0].mxu0
    %280 = vmatprep.mubr.f32.mxu0 %v78
    %281 = vmatmul.mubr.f32.gmra.mrb[0].mxu0 %v77
    %v282 = vpop.f32.mrb[0].mxu0
    %v283 = vadd.f32 0.0, %v282
    %v284 = vpop.f32.mrb[0].mxu0
    %285 = vmatprep.mubr.f32.mxu0 %v82
    %286 = vmatmul.mubr.f32.gmra.mrb[0].mxu0 %v81
    %v287 = vpop.f32.mrb[0].mxu0
    %v288 = vadd.f32 0.0, %v287
    %v289 = vpop.f32.mrb[0].mxu0
    %290 = vmatprep.mubr.f32.mxu0 %v86
    %291 = vmatmul.mubr.f32.gmra.mrb[0].mxu0 %v85
    %v292 = vpop.f32.mrb[0].mxu0
    %v293 = vadd.f32 0.0, %v292
    %v294 = vpop.f32.mrb[0].mxu0
    %295 = vmatprep.mubr.f32.mxu0 %v90
    %296 = vmatmul.mubr.f32.gmra.mrb[0].mxu0 %v89
    %v297 = vpop.f32.mrb[0].mxu0
    %v298 = vadd.f32 0.0, %v297
    %v299 = vpop.f32.mrb[0].mxu0
    %300 = vmatprep.mubr.f32.mxu0 %v94
    %301 = vmatmul.mubr.f32.gmra.mrb[0].mxu0 %v93
    %v302 = vpop.f32.mrb[0].mxu0
    %v303 = vadd.f32 0.0, %v302
    %v304 = vpop.f32.mrb[0].mxu0
    %305 = vdwg.mxu0
    %306 = vmatprep.subr.mxu0 0.0
    %307 = vmatpush1.msra.mxu0 %v129
    %308 = vmatprep.subr.mxu0 0.0
    %309 = vmatpush1.msra.mxu0 %v130
    %310 = vmatprep.subr.mxu0 0.0
    %311 = vmatpush1.msra.mxu0 %v131
    %312 = vmatprep.subr.mxu0 0.0
    %313 = vmatpush1.msra.mxu0 %v132
    %314 = vmatprep.subr.mxu0 0.0
    %315 = vmatpush1.msra.mxu0 %v133
    %316 = vmatprep.subr.mxu0 0.0
    %317 = vmatpush1.msra.mxu0 %v134
    %318 = vmatprep.subr.mxu0 0.0
    %319 = vmatpush1.msra.mxu0 %v135
    %320 = vmatprep.subr.mxu0 0.0
    %321 = vmatpush1.msra.mxu0 %v136
    %322 = vmatprep.subr.mxu0 0.0
    %323 = vmatpush1.msra.mxu0 %v137
    %324 = vmatprep.subr.mxu0 0.0
    %325 = vmatpush1.msra.mxu0 %v138
    %326 = vmatprep.subr.mxu0 0.0
    %327 = vmatpush1.msra.mxu0 %v139
    %328 = vmatprep.subr.mxu0 0.0
    %329 = vmatpush1.msra.mxu0 %v140
    %330 = vmatprep.subr.mxu0 0.0
    %331 = vmatpush1.msra.mxu0 %v141
    %332 = vmatprep.subr.mxu0 0.0
    %333 = vmatpush1.msra.mxu0 %v142
    %334 = vmatprep.subr.mxu0 0.0
    %335 = vmatpush1.msra.mxu0 %v143
    %336 = vmatprep.subr.mxu0 0.0
    %337 = vmatpush1.msra.mxu0 %v144
    %338 = vmatprep.subr.mxu0 0.0
    %339 = vmatpush1.msra.mxu0 %v145
    %340 = vmatprep.subr.mxu0 0.0
    %341 = vmatpush1.msra.mxu0 %v146
    %342 = vmatprep.subr.mxu0 0.0
    %343 = vmatpush1.msra.mxu0 %v147
    %344 = vmatprep.subr.mxu0 0.0
    %345 = vmatpush1.msra.mxu0 %v148
    %346 = vmatprep.subr.mxu0 0.0
    %347 = vmatpush1.msra.mxu0 %v149
    %348 = vmatprep.subr.mxu0 0.0
    %349 = vmatpush1.msra.mxu0 %v150
    %350 = vmatprep.subr.mxu0 0.0
    %351 = vmatpush1.msra.mxu0 %v151
    %352 = vmatprep.subr.mxu0 0.0
    %353 = vmatpush1.msra.mxu0 %v152
    %354 = vmatprep.subr.mxu0 0.0
    %355 = vmatpush1.msra.mxu0 %v153
    %356 = vmatprep.subr.mxu0 0.0
    %357 = vmatpush1.msra.mxu0 %v154
    %358 = vmatprep.subr.mxu0 0.0
    %359 = vmatpush1.msra.mxu0 %v155
    %360 = vmatprep.subr.mxu0 0.0
    %361 = vmatpush1.msra.mxu0 %v156
    %362 = vmatprep.subr.mxu0 0.0
    %363 = vmatpush1.msra.mxu0 %v157
    %364 = vmatprep.subr.mxu0 0.0
    %365 = vmatpush1.msra.mxu0 %v158
    %366 = vmatprep.subr.mxu0 0.0
    %367 = vmatpush1.msra.mxu0 %v159
    %368 = vmatprep.subr.mxu0 0.0
    %369 = vmatpush1.msra.mxu0 %v160
    %370 = vmatprep.mubr.f32.mxu0 %v36
    %371 = vmatmul.mubr.f32.gmra.mrb[0].mxu0 %v35
    %v372 = vpop.f32.mrb[0].mxu0
    %v373 = vadd.f32 %v228, %v372
    %v374 = vpop.f32.mrb[0].mxu0
    %375 = vmatprep.mubr.f32.mxu0 %v40
    %376 = vmatmul.mubr.f32.gmra.mrb[0].mxu0 %v39
    %v377 = vpop.f32.mrb[0].mxu0
    %v378 = vadd.f32 %v233, %v377
    %v379 = vpop.f32.mrb[0].mxu0
    %380 = vmatprep.mubr.f32.mxu0 %v44
    %381 = vmatmul.mubr.f32.gmra.mrb[0].mxu0 %v43
    %v382 = vpop.f32.mrb[0].mxu0
    %v383 = vadd.f32 %v238, %v382
    %v384 = vpop.f32.mrb[0].mxu0
    %385 = vmatprep.mubr.f32.mxu0 %v48
    %386 = vmatmul.mubr.f32.gmra.mrb[0].mxu0 %v47
    %v387 = vpop.f32.mrb[0].mxu0
    %v388 = vadd.f32 %v243, %v387
    %v389 = vpop.f32.mrb[0].mxu0
    %390 = vmatprep.mubr.f32.mxu0 %v52
    %391 = vmatmul.mubr.f32.gmra.mrb[0].mxu0 %v51
    %v392 = vpop.f32.mrb[0].mxu0
    %v393 = vadd.f32 %v248, %v392
    %v394 = vpop.f32.mrb[0].mxu0
    %395 = vmatprep.mubr.f32.mxu0 %v56
    %396 = vmatmul.mubr.f32.gmra.mrb[0].mxu0 %v55
    %v397 = vpop.f32.mrb[0].mxu0
    %v398 = vadd.f32 %v253, %v397
    %v399 = vpop.f32.mrb[0].mxu0
    %400 = vmatprep.mubr.f32.mxu0 %v60
    %401 = vmatmul.mubr.f32.gmra.mrb[0].mxu0 %v59
    %v402 = vpop.f32.mrb[0].mxu0
    %v403 = vadd.f32 %v258, %v402
    %v404 = vpop.f32.mrb[0].mxu0
    %405 = vmatprep.mubr.f32.mxu0 %v64
    %406 = vmatmul.mubr.f32.gmra.mrb[0].mxu0 %v63
    %v407 = vpop.f32.mrb[0].mxu0
    %v408 = vadd.f32 %v263, %v407
    %v409 = vpop.f32.mrb[0].mxu0
    %410 = vmatprep.mubr.f32.mxu0 %v68
    %411 = vmatmul.mubr.f32.gmra.mrb[0].mxu0 %v67
    %v412 = vpop.f32.mrb[0].mxu0
    %v413 = vadd.f32 %v268, %v412
    %v414 = vpop.f32.mrb[0].mxu0
    %415 = vmatprep.mubr.f32.mxu0 %v72
    %416 = vmatmul.mubr.f32.gmra.mrb[0].mxu0 %v71
    %v417 = vpop.f32.mrb[0].mxu0
    %v418 = vadd.f32 %v273, %v417
    %v419 = vpop.f32.mrb[0].mxu0
    %420 = vmatprep.mubr.f32.mxu0 %v76
    %421 = vmatmul.mubr.f32.gmra.mrb[0].mxu0 %v75
    %v422 = vpop.f32.mrb[0].mxu0
    %v423 = vadd.f32 %v278, %v422
    %v424 = vpop.f32.mrb[0].mxu0
    %425 = vmatprep.mubr.f32.mxu0 %v80
    %426 = vmatmul.mubr.f32.gmra.mrb[0].mxu0 %v79
    %v427 = vpop.f32.mrb[0].mxu0
    %v428 = vadd.f32 %v283, %v427
    %v429 = vpop.f32.mrb[0].mxu0
    %430 = vmatprep.mubr.f32.mxu0 %v84
    %431 = vmatmul.mubr.f32.gmra.mrb[0].mxu0 %v83
    %v432 = vpop.f32.mrb[0].mxu0
    %v433 = vadd.f32 %v288, %v432
    %v434 = vpop.f32.mrb[0].mxu0
    %435 = vmatprep.mubr.f32.mxu0 %v88
    %436 = vmatmul.mubr.f32.gmra.mrb[0].mxu0 %v87
    %v437 = vpop.f32.mrb[0].mxu0
    %v438 = vadd.f32 %v293, %v437
    %v439 = vpop.f32.mrb[0].mxu0
    %440 = vmatprep.mubr.f32.mxu0 %v92
    %441 = vmatmul.mubr.f32.gmra.mrb[0].mxu0 %v91
    %v442 = vpop.f32.mrb[0].mxu0
    %v443 = vadd.f32 %v298, %v442
    %v444 = vpop.f32.mrb[0].mxu0
    %445 = vmatprep.mubr.f32.mxu0 %v96
    %446 = vmatmul.mubr.f32.gmra.mrb[0].mxu0 %v95
    %v447 = vpop.f32.mrb[0].mxu0
    %v448 = vadd.f32 %v303, %v447
    %v449 = vpop.f32.mrb[0].mxu0
    %450 = vdwg.mxu0
    %v451 = vmax.f32 %v373, %v393
    %v452 = vmax.f32 %v378, %v398
    %v453 = vmax.f32 %v383, %v403
    %v454 = vmax.f32 %v388, %v408
    %v455 = vmax.f32 %v413, %v433
    %v456 = vmax.f32 %v418, %v438
    %v457 = vmax.f32 %v423, %v443
    %v458 = vmax.f32 %v428, %v448
    %v459 = vmax.f32 %v451, %v455
    %v460 = vmax.f32 %v452, %v456
    %v461 = vmax.f32 %v453, %v457
    %v462 = vmax.f32 %v454, %v458
    %v463 = vld [vmem:[%s2] sm:$0x1]
    %v465 = vlaneseq
    %v466 = vshrl.u32 %v465, 7
    %v467 = vsub.s32 0, %v466
    %v468 = vrot.slane %v463, %v467
    %v470 = vadd.f32 %v459, %v468
    %v471 = vadd.f32 %v460, %v468
    %v472 = vadd.f32 %v461, %v468
    %v473 = vadd.f32 %v462, %v468
    %v474 = vmax.f32 %v470, 0.0
    %v475 = vmax.f32 %v471, 0.0
    %v476 = vmax.f32 %v472, 0.0
    %v477 = vmax.f32 %v473, 0.0
    %478 = vst [vmem:[#allocation2] sm:$0xff] %v474
    %479 = vst [vmem:[#allocation2 + $0x8] sm:$0xff] %v475
    %480 = vst [vmem:[#allocation2 + $0x10] sm:$0xff] %v476
    %481 = vst [vmem:[#allocation2 + $0x18] sm:$0xff] %v477
    %v482 = vld [vmem:[#allocation2] sm:$0xff]
    %v483 = vld [vmem:[#allocation2 + $0x8] sm:$0xf]
    %v484 = vld [vmem:[%s3] sm:$0xff]
    %v485 = vld [vmem:[%s3 + $0x8] sm:$0xff]
    %v486 = vld [vmem:[%s3 + $0x10] sm:$0xff]
    %v487 = vld [vmem:[%s3 + $0x18] sm:$0xff]
    %v488 = vld [vmem:[%s3 + $0x20] sm:$0xff]
    %v489 = vld [vmem:[%s3 + $0x28] sm:$0xff]
    %v490 = vld [vmem:[%s3 + $0x30] sm:$0xff]
    %v491 = vld [vmem:[%s3 + $0x38] sm:$0xff]
    %v492 = vld [vmem:[%s3 + $0x40] sm:$0xff]
    %v493 = vld [vmem:[%s3 + $0x48] sm:$0xff]
    %v494 = vld [vmem:[%s3 + $0x50] sm:$0xff]
    %v495 = vld [vmem:[%s3 + $0x58] sm:$0xff]
    %v496 = vld [vmem:[%s3 + $0x60] sm:$0xff]
    %v497 = vld [vmem:[%s3 + $0x68] sm:$0xff]
    %v498 = vld [vmem:[%s3 + $0x70] sm:$0xff]
    %v499 = vld [vmem:[%s3 + $0x78] sm:$0xff]
    %v500 = vld [vmem:[%s3 + $0x80] sm:$0xff]
    %v501 = vld [vmem:[%s3 + $0x88] sm:$0xff]
    %v502 = vld [vmem:[%s3 + $0x90] sm:$0xff]
    %v503 = vld [vmem:[%s3 + $0x98] sm:$0xff]
    %v504 = vld [vmem:[%s3 + $0xa0] sm:$0xff]
    %v505 = vld [vmem:[%s3 + $0xa8] sm:$0xff]
    %v506 = vld [vmem:[%s3 + $0xb0] sm:$0xff]
    %v507 = vld [vmem:[%s3 + $0xb8] sm:$0xff]
    %v508 = vld [vmem:[%s3 + $0xc0] sm:$0xff]
    %v509 = vld [vmem:[%s3 + $0xc8] sm:$0xff]
    %v510 = vld [vmem:[%s3 + $0xd0] sm:$0xff]
    %v511 = vld [vmem:[%s3 + $0xd8] sm:$0xff]
    %v512 = vld [vmem:[%s3 + $0xe0] sm:$0xff]
    %v513 = vld [vmem:[%s3 + $0xe8] sm:$0xff]
    %v514 = vld [vmem:[%s3 + $0xf0] sm:$0xff]
    %v515 = vld [vmem:[%s3 + $0xf8] sm:$0xff]
    %v516 = vld [vmem:[#allocation2 + $0x10] sm:$0xff]
    %v517 = vld [vmem:[#allocation2 + $0x18] sm:$0xf]
    %s518 = scalar_lea.vmem %s3, 256
    %v519 = vld [vmem:[%s518] sm:$0xff]
    %v520 = vld [vmem:[%s518 + $0x8] sm:$0xff]
    %v521 = vld [vmem:[%s518 + $0x10] sm:$0xff]
    %v522 = vld [vmem:[%s518 + $0x18] sm:$0xff]
    %v523 = vld [vmem:[%s518 + $0x20] sm:$0xff]
    %v524 = vld [vmem:[%s518 + $0x28] sm:$0xff]
    %v525 = vld [vmem:[%s518 + $0x30] sm:$0xff]
    %v526 = vld [vmem:[%s518 + $0x38] sm:$0xff]
    %v527 = vld [vmem:[%s518 + $0x40] sm:$0xff]
    %v528 = vld [vmem:[%s518 + $0x48] sm:$0xff]
    %v529 = vld [vmem:[%s518 + $0x50] sm:$0xff]
    %v530 = vld [vmem:[%s518 + $0x58] sm:$0xff]
    %v531 = vld [vmem:[%s518 + $0x60] sm:$0xff]
    %v532 = vld [vmem:[%s518 + $0x68] sm:$0xff]
    %v533 = vld [vmem:[%s518 + $0x70] sm:$0xff]
    %v534 = vld [vmem:[%s518 + $0x78] sm:$0xff]
    %v535 = vld [vmem:[%s518 + $0x80] sm:$0xff]
    %v536 = vld [vmem:[%s518 + $0x88] sm:$0xff]
    %v537 = vld [vmem:[%s518 + $0x90] sm:$0xff]
    %v538 = vld [vmem:[%s518 + $0x98] sm:$0xff]
    %v539 = vld [vmem:[%s518 + $0xa0] sm:$0xff]
    %v540 = vld [vmem:[%s518 + $0xa8] sm:$0xff]
    %v541 = vld [vmem:[%s518 + $0xb0] sm:$0xff]
    %v542 = vld [vmem:[%s518 + $0xb8] sm:$0xff]
    %v543 = vld [vmem:[%s518 + $0xc0] sm:$0xff]
    %v544 = vld [vmem:[%s518 + $0xc8] sm:$0xff]
    %v545 = vld [vmem:[%s518 + $0xd0] sm:$0xff]
    %v546 = vld [vmem:[%s518 + $0xd8] sm:$0xff]
    %v547 = vld [vmem:[%s518 + $0xe0] sm:$0xff]
    %v548 = vld [vmem:[%s518 + $0xe8] sm:$0xff]
    %v549 = vld [vmem:[%s518 + $0xf0] sm:$0xff]
    %v550 = vld [vmem:[%s518 + $0xf8] sm:$0xff]
    %551 = vmatprep.subr.mxu0 %v520
    %552 = vmatpush1.msra.mxu0 %v519
    %553 = vmatprep.subr.mxu0 %v522
    %554 = vmatpush1.msra.mxu0 %v521
    %555 = vmatprep.subr.mxu0 %v524
    %556 = vmatpush1.msra.mxu0 %v523
    %557 = vmatprep.subr.mxu0 %v526
    %558 = vmatpush1.msra.mxu0 %v525
    %559 = vmatprep.subr.mxu0 %v528
    %560 = vmatpush1.msra.mxu0 %v527
    %561 = vmatprep.subr.mxu0 %v530
    %562 = vmatpush1.msra.mxu0 %v529
    %563 = vmatprep.subr.mxu0 %v532
    %564 = vmatpush1.msra.mxu0 %v531
    %565 = vmatprep.subr.mxu0 %v534
    %566 = vmatpush1.msra.mxu0 %v533
    %567 = vmatprep.subr.mxu0 %v536
    %568 = vmatpush1.msra.mxu0 %v535
    %569 = vmatprep.subr.mxu0 %v538
    %570 = vmatpush1.msra.mxu0 %v537
    %571 = vmatprep.subr.mxu0 %v540
    %572 = vmatpush1.msra.mxu0 %v539
    %573 = vmatprep.subr.mxu0 %v542
    %574 = vmatpush1.msra.mxu0 %v541
    %575 = vmatprep.subr.mxu0 %v544
    %576 = vmatpush1.msra.mxu0 %v543
    %577 = vmatprep.subr.mxu0 %v546
    %578 = vmatpush1.msra.mxu0 %v545
    %579 = vmatprep.subr.mxu0 %v548
    %580 = vmatpush1.msra.mxu0 %v547
    %581 = vmatprep.subr.mxu0 %v550
    %582 = vmatpush1.msra.mxu0 %v549
    %583 = vmatprep.subr.mxu0 0.0
    %584 = vmatpush1.msra.mxu0 0.0
    %585 = vmatprep.subr.mxu0 0.0
    %586 = vmatpush1.msra.mxu0 0.0
    %587 = vmatprep.subr.mxu0 0.0
    %588 = vmatpush1.msra.mxu0 0.0
    %589 = vmatprep.subr.mxu0 0.0
    %590 = vmatpush1.msra.mxu0 0.0
    %591 = vmatprep.subr.mxu0 0.0
    %592 = vmatpush1.msra.mxu0 0.0
    %593 = vmatprep.subr.mxu0 0.0
    %594 = vmatpush1.msra.mxu0 0.0
    %595 = vmatprep.subr.mxu0 0.0
    %596 = vmatpush1.msra.mxu0 0.0
    %597 = vmatprep.subr.mxu0 0.0
    %598 = vmatpush1.msra.mxu0 0.0
    %599 = vmatprep.subr.mxu0 0.0
    %600 = vmatpush1.msra.mxu0 0.0
    %601 = vmatprep.subr.mxu0 0.0
    %602 = vmatpush1.msra.mxu0 0.0
    %603 = vmatprep.subr.mxu0 0.0
    %604 = vmatpush1.msra.mxu0 0.0
    %605 = vmatprep.subr.mxu0 0.0
    %606 = vmatpush1.msra.mxu0 0.0
    %607 = vmatprep.subr.mxu0 0.0
    %608 = vmatpush1.msra.mxu0 0.0
    %609 = vmatprep.subr.mxu0 0.0
    %610 = vmatpush1.msra.mxu0 0.0
    %611 = vmatprep.subr.mxu0 0.0
    %612 = vmatpush1.msra.mxu0 0.0
    %613 = vmatprep.subr.mxu0 0.0
    %614 = vmatpush1.msra.mxu0 0.0
    %615 = vmatprep.mubr.f32.mxu0 0.0
    %616 = vmatmul.mubr.f32.gmra.mrb[0].mxu0 %v516
    %v617 = vpop.f32.mrb[0].mxu0
    %v618 = vadd.f32 0.0, %v617
    %v619 = vpop.f32.mrb[0].mxu0
    %v620 = vadd.f32 0.0, %v619
    %621 = vmatprep.mubr.f32.mxu0 0.0
    %622 = vmatmul.mubr.f32.gmra.mrb[0].mxu0 %v517
    %v623 = vpop.f32.mrb[0].mxu0
    %v624 = vadd.f32 0.0, %v623
    %v625 = vpop.f32.mrb[0].mxu0
    %v626 = vadd.f32 0.0, %v625
    %627 = vdwg.mxu0
    %628 = vmatprep.subr.mxu0 %v485
    %629 = vmatpush1.msra.mxu0 %v484
    %630 = vmatprep.subr.mxu0 %v487
    %631 = vmatpush1.msra.mxu0 %v486
    %632 = vmatprep.subr.mxu0 %v489
    %633 = vmatpush1.msra.mxu0 %v488
    %634 = vmatprep.subr.mxu0 %v491
    %635 = vmatpush1.msra.mxu0 %v490
    %636 = vmatprep.subr.mxu0 %v493
    %637 = vmatpush1.msra.mxu0 %v492
    %638 = vmatprep.subr.mxu0 %v495
    %639 = vmatpush1.msra.mxu0 %v494
    %640 = vmatprep.subr.mxu0 %v497
    %641 = vmatpush1.msra.mxu0 %v496
    %642 = vmatprep.subr.mxu0 %v499
    %643 = vmatpush1.msra.mxu0 %v498
    %644 = vmatprep.subr.mxu0 %v501
    %645 = vmatpush1.msra.mxu0 %v500
    %646 = vmatprep.subr.mxu0 %v503
    %647 = vmatpush1.msra.mxu0 %v502
    %648 = vmatprep.subr.mxu0 %v505
    %649 = vmatpush1.msra.mxu0 %v504
    %650 = vmatprep.subr.mxu0 %v507
    %651 = vmatpush1.msra.mxu0 %v506
    %652 = vmatprep.subr.mxu0 %v509
    %653 = vmatpush1.msra.mxu0 %v508
    %654 = vmatprep.subr.mxu0 %v511
    %655 = vmatpush1.msra.mxu0 %v510
    %656 = vmatprep.subr.mxu0 %v513
    %657 = vmatpush1.msra.mxu0 %v512
    %658 = vmatprep.subr.mxu0 %v515
    %659 = vmatpush1.msra.mxu0 %v514
    %660 = vmatprep.subr.mxu0 0.0
    %661 = vmatpush1.msra.mxu0 0.0
    %662 = vmatprep.subr.mxu0 0.0
    %663 = vmatpush1.msra.mxu0 0.0
    %664 = vmatprep.subr.mxu0 0.0
    %665 = vmatpush1.msra.mxu0 0.0
    %666 = vmatprep.subr.mxu0 0.0
    %667 = vmatpush1.msra.mxu0 0.0
    %668 = vmatprep.subr.mxu0 0.0
    %669 = vmatpush1.msra.mxu0 0.0
    %670 = vmatprep.subr.mxu0 0.0
    %671 = vmatpush1.msra.mxu0 0.0
    %672 = vmatprep.subr.mxu0 0.0
    %673 = vmatpush1.msra.mxu0 0.0
    %674 = vmatprep.subr.mxu0 0.0
    %675 = vmatpush1.msra.mxu0 0.0
    %676 = vmatprep.subr.mxu0 0.0
    %677 = vmatpush1.msra.mxu0 0.0
    %678 = vmatprep.subr.mxu0 0.0
    %679 = vmatpush1.msra.mxu0 0.0
    %680 = vmatprep.subr.mxu0 0.0
    %681 = vmatpush1.msra.mxu0 0.0
    %682 = vmatprep.subr.mxu0 0.0
    %683 = vmatpush1.msra.mxu0 0.0
    %684 = vmatprep.subr.mxu0 0.0
    %685 = vmatpush1.msra.mxu0 0.0
    %686 = vmatprep.subr.mxu0 0.0
    %687 = vmatpush1.msra.mxu0 0.0
    %688 = vmatprep.subr.mxu0 0.0
    %689 = vmatpush1.msra.mxu0 0.0
    %690 = vmatprep.subr.mxu0 0.0
    %691 = vmatpush1.msra.mxu0 0.0
    %692 = vmatprep.mubr.f32.mxu0 0.0
    %693 = vmatmul.mubr.f32.gmra.mrb[0].mxu0 %v482
    %v694 = vpop.f32.mrb[0].mxu0
    %v695 = vadd.f32 %v618, %v694
    %v696 = vpop.f32.mrb[0].mxu0
    %v697 = vadd.f32 %v620, %v696
    %698 = vmatprep.mubr.f32.mxu0 0.0
    %699 = vmatmul.mubr.f32.gmra.mrb[0].mxu0 %v483
    %v700 = vpop.f32.mrb[0].mxu0
    %v701 = vadd.f32 %v624, %v700
    %v702 = vpop.f32.mrb[0].mxu0
    %v703 = vadd.f32 %v626, %v702
    %704 = vdwg.mxu0
    %v705 = vld [vmem:[#allocation2 + $0x2] sm:$0xff]
    %v706 = vld [vmem:[#allocation2 + $0xa] sm:$0xf]
    %s707 = scalar_lea.vmem %s3, 512
    %v708 = vld [vmem:[%s707] sm:$0xff]
    %v709 = vld [vmem:[%s707 + $0x8] sm:$0xff]
    %v710 = vld [vmem:[%s707 + $0x10] sm:$0xff]
    %v711 = vld [vmem:[%s707 + $0x18] sm:$0xff]
    %v712 = vld [vmem:[%s707 + $0x20] sm:$0xff]
    %v713 = vld [vmem:[%s707 + $0x28] sm:$0xff]
    %v714 = vld [vmem:[%s707 + $0x30] sm:$0xff]
    %v715 = vld [vmem:[%s707 + $0x38] sm:$0xff]
    %v716 = vld [vmem:[%s707 + $0x40] sm:$0xff]
    %v717 = vld [vmem:[%s707 + $0x48] sm:$0xff]
    %v718 = vld [vmem:[%s707 + $0x50] sm:$0xff]
    %v719 = vld [vmem:[%s707 + $0x58] sm:$0xff]
    %v720 = vld [vmem:[%s707 + $0x60] sm:$0xff]
    %v721 = vld [vmem:[%s707 + $0x68] sm:$0xff]
    %v722 = vld [vmem:[%s707 + $0x70] sm:$0xff]
    %v723 = vld [vmem:[%s707 + $0x78] sm:$0xff]
    %v724 = vld [vmem:[%s707 + $0x80] sm:$0xff]
    %v725 = vld [vmem:[%s707 + $0x88] sm:$0xff]
    %v726 = vld [vmem:[%s707 + $0x90] sm:$0xff]
    %v727 = vld [vmem:[%s707 + $0x98] sm:$0xff]
    %v728 = vld [vmem:[%s707 + $0xa0] sm:$0xff]
    %v729 = vld [vmem:[%s707 + $0xa8] sm:$0xff]
    %v730 = vld [vmem:[%s707 + $0xb0] sm:$0xff]
    %v731 = vld [vmem:[%s707 + $0xb8] sm:$0xff]
    %v732 = vld [vmem:[%s707 + $0xc0] sm:$0xff]
    %v733 = vld [vmem:[%s707 + $0xc8] sm:$0xff]
    %v734 = vld [vmem:[%s707 + $0xd0] sm:$0xff]
    %v735 = vld [vmem:[%s707 + $0xd8] sm:$0xff]
    %v736 = vld [vmem:[%s707 + $0xe0] sm:$0xff]
    %v737 = vld [vmem:[%s707 + $0xe8] sm:$0xff]
    %v738 = vld [vmem:[%s707 + $0xf0] sm:$0xff]
    %v739 = vld [vmem:[%s707 + $0xf8] sm:$0xff]
    %740 = vmatprep.subr.mxu0 %v709
    %741 = vmatpush1.msra.mxu0 %v708
    %742 = vmatprep.subr.mxu0 %v711
    %743 = vmatpush1.msra.mxu0 %v710
    %744 = vmatprep.subr.mxu0 %v713
    %745 = vmatpush1.msra.mxu0 %v712
    %746 = vmatprep.subr.mxu0 %v715
    %747 = vmatpush1.msra.mxu0 %v714
    %748 = vmatprep.subr.mxu0 %v717
    %749 = vmatpush1.msra.mxu0 %v716
    %750 = vmatprep.subr.mxu0 %v719
    %751 = vmatpush1.msra.mxu0 %v718
    %752 = vmatprep.subr.mxu0 %v721
    %753 = vmatpush1.msra.mxu0 %v720
    %754 = vmatprep.subr.mxu0 %v723
    %755 = vmatpush1.msra.mxu0 %v722
    %756 = vmatprep.subr.mxu0 %v725
    %757 = vmatpush1.msra.mxu0 %v724
    %758 = vmatprep.subr.mxu0 %v727
    %759 = vmatpush1.msra.mxu0 %v726
    %760 = vmatprep.subr.mxu0 %v729
    %761 = vmatpush1.msra.mxu0 %v728
    %762 = vmatprep.subr.mxu0 %v731
    %763 = vmatpush1.msra.mxu0 %v730
    %764 = vmatprep.subr.mxu0 %v733
    %765 = vmatpush1.msra.mxu0 %v732
    %766 = vmatprep.subr.mxu0 %v735
    %767 = vmatpush1.msra.mxu0 %v734
    %768 = vmatprep.subr.mxu0 %v737
    %769 = vmatpush1.msra.mxu0 %v736
    %770 = vmatprep.subr.mxu0 %v739
    %771 = vmatpush1.msra.mxu0 %v738
    %772 = vmatprep.subr.mxu0 0.0
    %773 = vmatpush1.msra.mxu0 0.0
    %774 = vmatprep.subr.mxu0 0.0
    %775 = vmatpush1.msra.mxu0 0.0
    %776 = vmatprep.subr.mxu0 0.0
    %777 = vmatpush1.msra.mxu0 0.0
    %778 = vmatprep.subr.mxu0 0.0
    %779 = vmatpush1.msra.mxu0 0.0
    %780 = vmatprep.subr.mxu0 0.0
    %781 = vmatpush1.msra.mxu0 0.0
    %782 = vmatprep.subr.mxu0 0.0
    %783 = vmatpush1.msra.mxu0 0.0
    %784 = vmatprep.subr.mxu0 0.0
    %785 = vmatpush1.msra.mxu0 0.0
    %786 = vmatprep.subr.mxu0 0.0
    %787 = vmatpush1.msra.mxu0 0.0
    %788 = vmatprep.subr.mxu0 0.0
    %789 = vmatpush1.msra.mxu0 0.0
    %790 = vmatprep.subr.mxu0 0.0
    %791 = vmatpush1.msra.mxu0 0.0
    %792 = vmatprep.subr.mxu0 0.0
    %793 = vmatpush1.msra.mxu0 0.0
    %794 = vmatprep.subr.mxu0 0.0
    %795 = vmatpush1.msra.mxu0 0.0
    %796 = vmatprep.subr.mxu0 0.0
    %797 = vmatpush1.msra.mxu0 0.0
    %798 = vmatprep.subr.mxu0 0.0
    %799 = vmatpush1.msra.mxu0 0.0
    %800 = vmatprep.subr.mxu0 0.0
    %801 = vmatpush1.msra.mxu0 0.0
    %802 = vmatprep.subr.mxu0 0.0
    %803 = vmatpush1.msra.mxu0 0.0
    %804 = vmatprep.mubr.f32.mxu0 0.0
    %805 = vmatmul.mubr.f32.gmra.mrb[0].mxu0 %v705
    %v806 = vpop.f32.mrb[0].mxu0
    %v807 = vadd.f32 0.0, %v806
    %v808 = vpop.f32.mrb[0].mxu0
    %v809 = vadd.f32 0.0, %v808
    %810 = vmatprep.mubr.f32.mxu0 0.0
    %811 = vmatmul.mubr.f32.gmra.mrb[0].mxu0 %v706
    %v812 = vpop.f32.mrb[0].mxu0
    %v813 = vadd.f32 0.0, %v812
    %v814 = vpop.f32.mrb[0].mxu0
    %v815 = vadd.f32 0.0, %v814
    %816 = vdwg.mxu0
    %v817 = vadd.f32 %v695, %v807
    %v818 = vadd.f32 %v697, %v809
    %v819 = vadd.f32 %v701, %v813
    %v820 = vadd.f32 %v703, %v815
    %v821 = vld [vmem:[#allocation2 + $0x12] sm:$0xff]
    %v822 = vld [vmem:[#allocation2 + $0x1a] sm:$0xf]
    %s823 = scalar_lea.vmem %s3, 768
    %v824 = vld [vmem:[%s823] sm:$0xff]
    %v825 = vld [vmem:[%s823 + $0x8] sm:$0xff]
    %v826 = vld [vmem:[%s823 + $0x10] sm:$0xff]
    %v827 = vld [vmem:[%s823 + $0x18] sm:$0xff]
    %v828 = vld [vmem:[%s823 + $0x20] sm:$0xff]
    %v829 = vld [vmem:[%s823 + $0x28] sm:$0xff]
    %v830 = vld [vmem:[%s823 + $0x30] sm:$0xff]
    %v831 = vld [vmem:[%s823 + $0x38] sm:$0xff]
    %v832 = vld [vmem:[%s823 + $0x40] sm:$0xff]
    %v833 = vld [vmem:[%s823 + $0x48] sm:$0xff]
    %v834 = vld [vmem:[%s823 + $0x50] sm:$0xff]
    %v835 = vld [vmem:[%s823 + $0x58] sm:$0xff]
    %v836 = vld [vmem:[%s823 + $0x60] sm:$0xff]
    %v837 = vld [vmem:[%s823 + $0x68] sm:$0xff]
    %v838 = vld [vmem:[%s823 + $0x70] sm:$0xff]
    %v839 = vld [vmem:[%s823 + $0x78] sm:$0xff]
    %v840 = vld [vmem:[%s823 + $0x80] sm:$0xff]
    %v841 = vld [vmem:[%s823 + $0x88] sm:$0xff]
    %v842 = vld [vmem:[%s823 + $0x90] sm:$0xff]
    %v843 = vld [vmem:[%s823 + $0x98] sm:$0xff]
    %v844 = vld [vmem:[%s823 + $0xa0] sm:$0xff]
    %v845 = vld [vmem:[%s823 + $0xa8] sm:$0xff]
    %v846 = vld [vmem:[%s823 + $0xb0] sm:$0xff]
    %v847 = vld [vmem:[%s823 + $0xb8] sm:$0xff]
    %v848 = vld [vmem:[%s823 + $0xc0] sm:$0xff]
    %v849 = vld [vmem:[%s823 + $0xc8] sm:$0xff]
    %v850 = vld [vmem:[%s823 + $0xd0] sm:$0xff]
    %v851 = vld [vmem:[%s823 + $0xd8] sm:$0xff]
    %v852 = vld [vmem:[%s823 + $0xe0] sm:$0xff]
    %v853 = vld [vmem:[%s823 + $0xe8] sm:$0xff]
    %v854 = vld [vmem:[%s823 + $0xf0] sm:$0xff]
    %v855 = vld [vmem:[%s823 + $0xf8] sm:$0xff]
    %856 = vmatprep.subr.mxu0 %v825
    %857 = vmatpush1.msra.mxu0 %v824
    %858 = vmatprep.subr.mxu0 %v827
    %859 = vmatpush1.msra.mxu0 %v826
    %860 = vmatprep.subr.mxu0 %v829
    %861 = vmatpush1.msra.mxu0 %v828
    %862 = vmatprep.subr.mxu0 %v831
    %863 = vmatpush1.msra.mxu0 %v830
    %864 = vmatprep.subr.mxu0 %v833
    %865 = vmatpush1.msra.mxu0 %v832
    %866 = vmatprep.subr.mxu0 %v835
    %867 = vmatpush1.msra.mxu0 %v834
    %868 = vmatprep.subr.mxu0 %v837
    %869 = vmatpush1.msra.mxu0 %v836
    %870 = vmatprep.subr.mxu0 %v839
    %871 = vmatpush1.msra.mxu0 %v838
    %872 = vmatprep.subr.mxu0 %v841
    %873 = vmatpush1.msra.mxu0 %v840
    %874 = vmatprep.subr.mxu0 %v843
    %875 = vmatpush1.msra.mxu0 %v842
    %876 = vmatprep.subr.mxu0 %v845
    %877 = vmatpush1.msra.mxu0 %v844
    %878 = vmatprep.subr.mxu0 %v847
    %879 = vmatpush1.msra.mxu0 %v846
    %880 = vmatprep.subr.mxu0 %v849
    %881 = vmatpush1.msra.mxu0 %v848
    %882 = vmatprep.subr.mxu0 %v851
    %883 = vmatpush1.msra.mxu0 %v850
    %884 = vmatprep.subr.mxu0 %v853
    %885 = vmatpush1.msra.mxu0 %v852
    %886 = vmatprep.subr.mxu0 %v855
    %887 = vmatpush1.msra.mxu0 %v854
    %888 = vmatprep.subr.mxu0 0.0
    %889 = vmatpush1.msra.mxu0 0.0
    %890 = vmatprep.subr.mxu0 0.0
    %891 = vmatpush1.msra.mxu0 0.0
    %892 = vmatprep.subr.mxu0 0.0
    %893 = vmatpush1.msra.mxu0 0.0
    %894 = vmatprep.subr.mxu0 0.0
    %895 = vmatpush1.msra.mxu0 0.0
    %896 = vmatprep.subr.mxu0 0.0
    %897 = vmatpush1.msra.mxu0 0.0
    %898 = vmatprep.subr.mxu0 0.0
    %899 = vmatpush1.msra.mxu0 0.0
    %900 = vmatprep.subr.mxu0 0.0
    %901 = vmatpush1.msra.mxu0 0.0
    %902 = vmatprep.subr.mxu0 0.0
    %903 = vmatpush1.msra.mxu0 0.0
    %904 = vmatprep.subr.mxu0 0.0
    %905 = vmatpush1.msra.mxu0 0.0
    %906 = vmatprep.subr.mxu0 0.0
    %907 = vmatpush1.msra.mxu0 0.0
    %908 = vmatprep.subr.mxu0 0.0
    %909 = vmatpush1.msra.mxu0 0.0
    %910 = vmatprep.subr.mxu0 0.0
    %911 = vmatpush1.msra.mxu0 0.0
    %912 = vmatprep.subr.mxu0 0.0
    %913 = vmatpush1.msra.mxu0 0.0
    %914 = vmatprep.subr.mxu0 0.0
    %915 = vmatpush1.msra.mxu0 0.0
    %916 = vmatprep.subr.mxu0 0.0
    %917 = vmatpush1.msra.mxu0 0.0
    %918 = vmatprep.subr.mxu0 0.0
    %919 = vmatpush1.msra.mxu0 0.0
    %920 = vmatprep.mubr.f32.mxu0 0.0
    %921 = vmatmul.mubr.f32.gmra.mrb[0].mxu0 %v821
    %v922 = vpop.f32.mrb[0].mxu0
    %v923 = vadd.f32 0.0, %v922
    %v924 = vpop.f32.mrb[0].mxu0
    %v925 = vadd.f32 0.0, %v924
    %926 = vmatprep.mubr.f32.mxu0 0.0
    %927 = vmatmul.mubr.f32.gmra.mrb[0].mxu0 %v822
    %v928 = vpop.f32.mrb[0].mxu0
    %v929 = vadd.f32 0.0, %v928
    %v930 = vpop.f32.mrb[0].mxu0
    %v931 = vadd.f32 0.0, %v930
    %932 = vdwg.mxu0
    %v933 = vadd.f32 %v817, %v923
    %v934 = vadd.f32 %v818, %v925
    %v935 = vadd.f32 %v819, %v929
    %v936 = vadd.f32 %v820, %v931
    %v937 = vld [vmem:[#allocation2 + $0x4] sm:$0xff]
    %v938 = vld [vmem:[#allocation2 + $0xc] sm:$0xf]
    %s939 = scalar_lea.vmem %s3, 1024
    %v940 = vld [vmem:[%s939] sm:$0xff]
    %v941 = vld [vmem:[%s939 + $0x8] sm:$0xff]
    %v942 = vld [vmem:[%s939 + $0x10] sm:$0xff]
    %v943 = vld [vmem:[%s939 + $0x18] sm:$0xff]
    %v944 = vld [vmem:[%s939 + $0x20] sm:$0xff]
    %v945 = vld [vmem:[%s939 + $0x28] sm:$0xff]
    %v946 = vld [vmem:[%s939 + $0x30] sm:$0xff]
    %v947 = vld [vmem:[%s939 + $0x38] sm:$0xff]
    %v948 = vld [vmem:[%s939 + $0x40] sm:$0xff]
    %v949 = vld [vmem:[%s939 + $0x48] sm:$0xff]
    %v950 = vld [vmem:[%s939 + $0x50] sm:$0xff]
    %v951 = vld [vmem:[%s939 + $0x58] sm:$0xff]
    %v952 = vld [vmem:[%s939 + $0x60] sm:$0xff]
    %v953 = vld [vmem:[%s939 + $0x68] sm:$0xff]
    %v954 = vld [vmem:[%s939 + $0x70] sm:$0xff]
    %v955 = vld [vmem:[%s939 + $0x78] sm:$0xff]
    %v956 = vld [vmem:[%s939 + $0x80] sm:$0xff]
    %v957 = vld [vmem:[%s939 + $0x88] sm:$0xff]
    %v958 = vld [vmem:[%s939 + $0x90] sm:$0xff]
    %v959 = vld [vmem:[%s939 + $0x98] sm:$0xff]
    %v960 = vld [vmem:[%s939 + $0xa0] sm:$0xff]
    %v961 = vld [vmem:[%s939 + $0xa8] sm:$0xff]
    %v962 = vld [vmem:[%s939 + $0xb0] sm:$0xff]
    %v963 = vld [vmem:[%s939 + $0xb8] sm:$0xff]
    %v964 = vld [vmem:[%s939 + $0xc0] sm:$0xff]
    %v965 = vld [vmem:[%s939 + $0xc8] sm:$0xff]
    %v966 = vld [vmem:[%s939 + $0xd0] sm:$0xff]
    %v967 = vld [vmem:[%s939 + $0xd8] sm:$0xff]
    %v968 = vld [vmem:[%s939 + $0xe0] sm:$0xff]
    %v969 = vld [vmem:[%s939 + $0xe8] sm:$0xff]
    %v970 = vld [vmem:[%s939 + $0xf0] sm:$0xff]
    %v971 = vld [vmem:[%s939 + $0xf8] sm:$0xff]
    %972 = vmatprep.subr.mxu0 %v941
    %973 = vmatpush1.msra.mxu0 %v940
    %974 = vmatprep.subr.mxu0 %v943
    %975 = vmatpush1.msra.mxu0 %v942
    %976 = vmatprep.subr.mxu0 %v945
    %977 = vmatpush1.msra.mxu0 %v944
    %978 = vmatprep.subr.mxu0 %v947
    %979 = vmatpush1.msra.mxu0 %v946
    %980 = vmatprep.subr.mxu0 %v949
    %981 = vmatpush1.msra.mxu0 %v948
    %982 = vmatprep.subr.mxu0 %v951
    %983 = vmatpush1.msra.mxu0 %v950
    %984 = vmatprep.subr.mxu0 %v953
    %985 = vmatpush1.msra.mxu0 %v952
    %986 = vmatprep.subr.mxu0 %v955
    %987 = vmatpush1.msra.mxu0 %v954
    %988 = vmatprep.subr.mxu0 %v957
    %989 = vmatpush1.msra.mxu0 %v956
    %990 = vmatprep.subr.mxu0 %v959
    %991 = vmatpush1.msra.mxu0 %v958
    %992 = vmatprep.subr.mxu0 %v961
    %993 = vmatpush1.msra.mxu0 %v960
    %994 = vmatprep.subr.mxu0 %v963
    %995 = vmatpush1.msra.mxu0 %v962
    %996 = vmatprep.subr.mxu0 %v965
    %997 = vmatpush1.msra.mxu0 %v964
    %998 = vmatprep.subr.mxu0 %v967
    %999 = vmatpush1.msra.mxu0 %v966
    %1000 = vmatprep.subr.mxu0 %v969
    %1001 = vmatpush1.msra.mxu0 %v968
    %1002 = vmatprep.subr.mxu0 %v971
    %1003 = vmatpush1.msra.mxu0 %v970
    %1004 = vmatprep.subr.mxu0 0.0
    %1005 = vmatpush1.msra.mxu0 0.0
    %1006 = vmatprep.subr.mxu0 0.0
    %1007 = vmatpush1.msra.mxu0 0.0
    %1008 = vmatprep.subr.mxu0 0.0
    %1009 = vmatpush1.msra.mxu0 0.0
    %1010 = vmatprep.subr.mxu0 0.0
    %1011 = vmatpush1.msra.mxu0 0.0
    %1012 = vmatprep.subr.mxu0 0.0
    %1013 = vmatpush1.msra.mxu0 0.0
    %1014 = vmatprep.subr.mxu0 0.0
    %1015 = vmatpush1.msra.mxu0 0.0
    %1016 = vmatprep.subr.mxu0 0.0
    %1017 = vmatpush1.msra.mxu0 0.0
    %1018 = vmatprep.subr.mxu0 0.0
    %1019 = vmatpush1.msra.mxu0 0.0
    %1020 = vmatprep.subr.mxu0 0.0
    %1021 = vmatpush1.msra.mxu0 0.0
    %1022 = vmatprep.subr.mxu0 0.0
    %1023 = vmatpush1.msra.mxu0 0.0
    %1024 = vmatprep.subr.mxu0 0.0
    %1025 = vmatpush1.msra.mxu0 0.0
    %1026 = vmatprep.subr.mxu0 0.0
    %1027 = vmatpush1.msra.mxu0 0.0
    %1028 = vmatprep.subr.mxu0 0.0
    %1029 = vmatpush1.msra.mxu0 0.0
    %1030 = vmatprep.subr.mxu0 0.0
    %1031 = vmatpush1.msra.mxu0 0.0
    %1032 = vmatprep.subr.mxu0 0.0
    %1033 = vmatpush1.msra.mxu0 0.0
    %1034 = vmatprep.subr.mxu0 0.0
    %1035 = vmatpush1.msra.mxu0 0.0
    %1036 = vmatprep.mubr.f32.mxu0 0.0
    %1037 = vmatmul.mubr.f32.gmra.mrb[0].mxu0 %v937
    %v1038 = vpop.f32.mrb[0].mxu0
    %v1039 = vadd.f32 0.0, %v1038
    %v1040 = vpop.f32.mrb[0].mxu0
    %v1041 = vadd.f32 0.0, %v1040
    %1042 = vmatprep.mubr.f32.mxu0 0.0
    %1043 = vmatmul.mubr.f32.gmra.mrb[0].mxu0 %v938
    %v1044 = vpop.f32.mrb[0].mxu0
    %v1045 = vadd.f32 0.0, %v1044
    %v1046 = vpop.f32.mrb[0].mxu0
    %v1047 = vadd.f32 0.0, %v1046
    %1048 = vdwg.mxu0
    %v1049 = vadd.f32 %v933, %v1039
    %v1050 = vadd.f32 %v934, %v1041
    %v1051 = vadd.f32 %v935, %v1045
    %v1052 = vadd.f32 %v936, %v1047
    %1053 = vmatprep.subr.mxu0 %v520
    %1054 = vmatpush1.msra.mxu0 %v519
    %1055 = vmatprep.subr.mxu0 %v522
    %1056 = vmatpush1.msra.mxu0 %v521
    %1057 = vmatprep.subr.mxu0 %v524
    %1058 = vmatpush1.msra.mxu0 %v523
    %1059 = vmatprep.subr.mxu0 %v526
    %1060 = vmatpush1.msra.mxu0 %v525
    %1061 = vmatprep.subr.mxu0 %v528
    %1062 = vmatpush1.msra.mxu0 %v527
    %1063 = vmatprep.subr.mxu0 %v530
    %1064 = vmatpush1.msra.mxu0 %v529
    %1065 = vmatprep.subr.mxu0 %v532
    %1066 = vmatpush1.msra.mxu0 %v531
    %1067 = vmatprep.subr.mxu0 %v534
    %1068 = vmatpush1.msra.mxu0 %v533
    %1069 = vmatprep.subr.mxu0 %v536
    %1070 = vmatpush1.msra.mxu0 %v535
    %1071 = vmatprep.subr.mxu0 %v538
    %1072 = vmatpush1.msra.mxu0 %v537
    %1073 = vmatprep.subr.mxu0 %v540
    %1074 = vmatpush1.msra.mxu0 %v539
    %1075 = vmatprep.subr.mxu0 %v542
    %1076 = vmatpush1.msra.mxu0 %v541
    %1077 = vmatprep.subr.mxu0 %v544
    %1078 = vmatpush1.msra.mxu0 %v543
    %1079 = vmatprep.subr.mxu0 %v546
    %1080 = vmatpush1.msra.mxu0 %v545
    %1081 = vmatprep.subr.mxu0 %v548
    %1082 = vmatpush1.msra.mxu0 %v547
    %1083 = vmatprep.subr.mxu0 %v550
    %1084 = vmatpush1.msra.mxu0 %v549
    %1085 = vmatprep.subr.mxu0 0.0
    %1086 = vmatpush1.msra.mxu0 0.0
    %1087 = vmatprep.subr.mxu0 0.0
    %1088 = vmatpush1.msra.mxu0 0.0
    %1089 = vmatprep.subr.mxu0 0.0
    %1090 = vmatpush1.msra.mxu0 0.0
    %1091 = vmatprep.subr.mxu0 0.0
    %1092 = vmatpush1.msra.mxu0 0.0
    %1093 = vmatprep.subr.mxu0 0.0
    %1094 = vmatpush1.msra.mxu0 0.0
    %1095 = vmatprep.subr.mxu0 0.0
    %1096 = vmatpush1.msra.mxu0 0.0
    %1097 = vmatprep.subr.mxu0 0.0
    %1098 = vmatpush1.msra.mxu0 0.0
    %1099 = vmatprep.subr.mxu0 0.0
    %1100 = vmatpush1.msra.mxu0 0.0
    %1101 = vmatprep.subr.mxu0 0.0
    %1102 = vmatpush1.msra.mxu0 0.0
    %1103 = vmatprep.subr.mxu0 0.0
    %1104 = vmatpush1.msra.mxu0 0.0
    %1105 = vmatprep.subr.mxu0 0.0
    %1106 = vmatpush1.msra.mxu0 0.0
    %1107 = vmatprep.subr.mxu0 0.0
    %1108 = vmatpush1.msra.mxu0 0.0
    %1109 = vmatprep.subr.mxu0 0.0
    %1110 = vmatpush1.msra.mxu0 0.0
    %1111 = vmatprep.subr.mxu0 0.0
    %1112 = vmatpush1.msra.mxu0 0.0
    %1113 = vmatprep.subr.mxu0 0.0
    %1114 = vmatpush1.msra.mxu0 0.0
    %1115 = vmatprep.subr.mxu0 0.0
    %1116 = vmatpush1.msra.mxu0 0.0
    %1117 = vmatprep.mubr.f32.mxu0 0.0
    %1118 = vmatmul.mubr.f32.gmra.mrb[0].mxu0 %v705
    %v1119 = vpop.f32.mrb[0].mxu0
    %v1120 = vadd.f32 0.0, %v1119
    %v1121 = vpop.f32.mrb[0].mxu0
    %v1122 = vadd.f32 0.0, %v1121
    %1123 = vmatprep.mubr.f32.mxu0 0.0
    %1124 = vmatmul.mubr.f32.gmra.mrb[0].mxu0 %v706
    %v1125 = vpop.f32.mrb[0].mxu0
    %v1126 = vadd.f32 0.0, %v1125
    %v1127 = vpop.f32.mrb[0].mxu0
    %v1128 = vadd.f32 0.0, %v1127
    %1129 = vdwg.mxu0
    %1130 = vmatprep.subr.mxu0 %v485
    %1131 = vmatpush1.msra.mxu0 %v484
    %1132 = vmatprep.subr.mxu0 %v487
    %1133 = vmatpush1.msra.mxu0 %v486
    %1134 = vmatprep.subr.mxu0 %v489
    %1135 = vmatpush1.msra.mxu0 %v488
    %1136 = vmatprep.subr.mxu0 %v491
    %1137 = vmatpush1.msra.mxu0 %v490
    %1138 = vmatprep.subr.mxu0 %v493
    %1139 = vmatpush1.msra.mxu0 %v492
    %1140 = vmatprep.subr.mxu0 %v495
    %1141 = vmatpush1.msra.mxu0 %v494
    %1142 = vmatprep.subr.mxu0 %v497
    %1143 = vmatpush1.msra.mxu0 %v496
    %1144 = vmatprep.subr.mxu0 %v499
    %1145 = vmatpush1.msra.mxu0 %v498
    %1146 = vmatprep.subr.mxu0 %v501
    %1147 = vmatpush1.msra.mxu0 %v500
    %1148 = vmatprep.subr.mxu0 %v503
    %1149 = vmatpush1.msra.mxu0 %v502
    %1150 = vmatprep.subr.mxu0 %v505
    %1151 = vmatpush1.msra.mxu0 %v504
    %1152 = vmatprep.subr.mxu0 %v507
    %1153 = vmatpush1.msra.mxu0 %v506
    %1154 = vmatprep.subr.mxu0 %v509
    %1155 = vmatpush1.msra.mxu0 %v508
    %1156 = vmatprep.subr.mxu0 %v511
    %1157 = vmatpush1.msra.mxu0 %v510
    %1158 = vmatprep.subr.mxu0 %v513
    %1159 = vmatpush1.msra.mxu0 %v512
    %1160 = vmatprep.subr.mxu0 %v515
    %1161 = vmatpush1.msra.mxu0 %v514
    %1162 = vmatprep.subr.mxu0 0.0
    %1163 = vmatpush1.msra.mxu0 0.0
    %1164 = vmatprep.subr.mxu0 0.0
    %1165 = vmatpush1.msra.mxu0 0.0
    %1166 = vmatprep.subr.mxu0 0.0
    %1167 = vmatpush1.msra.mxu0 0.0
    %1168 = vmatprep.subr.mxu0 0.0
    %1169 = vmatpush1.msra.mxu0 0.0
    %1170 = vmatprep.subr.mxu0 0.0
    %1171 = vmatpush1.msra.mxu0 0.0
    %1172 = vmatprep.subr.mxu0 0.0
    %1173 = vmatpush1.msra.mxu0 0.0
    %1174 = vmatprep.subr.mxu0 0.0
    %1175 = vmatpush1.msra.mxu0 0.0
    %1176 = vmatprep.subr.mxu0 0.0
    %1177 = vmatpush1.msra.mxu0 0.0
    %1178 = vmatprep.subr.mxu0 0.0
    %1179 = vmatpush1.msra.mxu0 0.0
    %1180 = vmatprep.subr.mxu0 0.0
    %1181 = vmatpush1.msra.mxu0 0.0
    %1182 = vmatprep.subr.mxu0 0.0
    %1183 = vmatpush1.msra.mxu0 0.0
    %1184 = vmatprep.subr.mxu0 0.0
    %1185 = vmatpush1.msra.mxu0 0.0
    %1186 = vmatprep.subr.mxu0 0.0
    %1187 = vmatpush1.msra.mxu0 0.0
    %1188 = vmatprep.subr.mxu0 0.0
    %1189 = vmatpush1.msra.mxu0 0.0
    %1190 = vmatprep.subr.mxu0 0.0
    %1191 = vmatpush1.msra.mxu0 0.0
    %1192 = vmatprep.subr.mxu0 0.0
    %1193 = vmatpush1.msra.mxu0 0.0
    %1194 = vmatprep.mubr.f32.mxu0 0.0
    %1195 = vmatmul.mubr.f32.gmra.mrb[0].mxu0 %v516
    %v1196 = vpop.f32.mrb[0].mxu0
    %v1197 = vadd.f32 %v1120, %v1196
    %v1198 = vpop.f32.mrb[0].mxu0
    %v1199 = vadd.f32 %v1122, %v1198
    %1200 = vmatprep.mubr.f32.mxu0 0.0
    %1201 = vmatmul.mubr.f32.gmra.mrb[0].mxu0 %v517
    %v1202 = vpop.f32.mrb[0].mxu0
    %v1203 = vadd.f32 %v1126, %v1202
    %v1204 = vpop.f32.mrb[0].mxu0
    %v1205 = vadd.f32 %v1128, %v1204
    %1206 = vdwg.mxu0
    %1207 = vmatprep.subr.mxu0 %v709
    %1208 = vmatpush1.msra.mxu0 %v708
    %1209 = vmatprep.subr.mxu0 %v711
    %1210 = vmatpush1.msra.mxu0 %v710
    %1211 = vmatprep.subr.mxu0 %v713
    %1212 = vmatpush1.msra.mxu0 %v712
    %1213 = vmatprep.subr.mxu0 %v715
    %1214 = vmatpush1.msra.mxu0 %v714
    %1215 = vmatprep.subr.mxu0 %v717
    %1216 = vmatpush1.msra.mxu0 %v716
    %1217 = vmatprep.subr.mxu0 %v719
    %1218 = vmatpush1.msra.mxu0 %v718
    %1219 = vmatprep.subr.mxu0 %v721
    %1220 = vmatpush1.msra.mxu0 %v720
    %1221 = vmatprep.subr.mxu0 %v723
    %1222 = vmatpush1.msra.mxu0 %v722
    %1223 = vmatprep.subr.mxu0 %v725
    %1224 = vmatpush1.msra.mxu0 %v724
    %1225 = vmatprep.subr.mxu0 %v727
    %1226 = vmatpush1.msra.mxu0 %v726
    %1227 = vmatprep.subr.mxu0 %v729
    %1228 = vmatpush1.msra.mxu0 %v728
    %1229 = vmatprep.subr.mxu0 %v731
    %1230 = vmatpush1.msra.mxu0 %v730
    %1231 = vmatprep.subr.mxu0 %v733
    %1232 = vmatpush1.msra.mxu0 %v732
    %1233 = vmatprep.subr.mxu0 %v735
    %1234 = vmatpush1.msra.mxu0 %v734
    %1235 = vmatprep.subr.mxu0 %v737
    %1236 = vmatpush1.msra.mxu0 %v736
    %1237 = vmatprep.subr.mxu0 %v739
    %1238 = vmatpush1.msra.mxu0 %v738
    %1239 = vmatprep.subr.mxu0 0.0
    %1240 = vmatpush1.msra.mxu0 0.0
    %1241 = vmatprep.subr.mxu0 0.0
    %1242 = vmatpush1.msra.mxu0 0.0
    %1243 = vmatprep.subr.mxu0 0.0
    %1244 = vmatpush1.msra.mxu0 0.0
    %1245 = vmatprep.subr.mxu0 0.0
    %1246 = vmatpush1.msra.mxu0 0.0
    %1247 = vmatprep.subr.mxu0 0.0
    %1248 = vmatpush1.msra.mxu0 0.0
    %1249 = vmatprep.subr.mxu0 0.0
    %1250 = vmatpush1.msra.mxu0 0.0
    %1251 = vmatprep.subr.mxu0 0.0
    %1252 = vmatpush1.msra.mxu0 0.0
    %1253 = vmatprep.subr.mxu0 0.0
    %1254 = vmatpush1.msra.mxu0 0.0
    %1255 = vmatprep.subr.mxu0 0.0
    %1256 = vmatpush1.msra.mxu0 0.0
    %1257 = vmatprep.subr.mxu0 0.0
    %1258 = vmatpush1.msra.mxu0 0.0
    %1259 = vmatprep.subr.mxu0 0.0
    %1260 = vmatpush1.msra.mxu0 0.0
    %1261 = vmatprep.subr.mxu0 0.0
    %1262 = vmatpush1.msra.mxu0 0.0
    %1263 = vmatprep.subr.mxu0 0.0
    %1264 = vmatpush1.msra.mxu0 0.0
    %1265 = vmatprep.subr.mxu0 0.0
    %1266 = vmatpush1.msra.mxu0 0.0
    %1267 = vmatprep.subr.mxu0 0.0
    %1268 = vmatpush1.msra.mxu0 0.0
    %1269 = vmatprep.subr.mxu0 0.0
    %1270 = vmatpush1.msra.mxu0 0.0
    %1271 = vmatprep.mubr.f32.mxu0 0.0
    %1272 = vmatmul.mubr.f32.gmra.mrb[0].mxu0 %v821
    %v1273 = vpop.f32.mrb[0].mxu0
    %v1274 = vadd.f32 0.0, %v1273
    %v1275 = vpop.f32.mrb[0].mxu0
    %v1276 = vadd.f32 0.0, %v1275
    %1277 = vmatprep.mubr.f32.mxu0 0.0
    %1278 = vmatmul.mubr.f32.gmra.mrb[0].mxu0 %v822
    %v1279 = vpop.f32.mrb[0].mxu0
    %v1280 = vadd.f32 0.0, %v1279
    %v1281 = vpop.f32.mrb[0].mxu0
    %v1282 = vadd.f32 0.0, %v1281
    %1283 = vdwg.mxu0
    %v1284 = vadd.f32 %v1197, %v1274
    %v1285 = vadd.f32 %v1199, %v1276
    %v1286 = vadd.f32 %v1203, %v1280
    %v1287 = vadd.f32 %v1205, %v1282
    %1288 = vmatprep.subr.mxu0 %v825
    %1289 = vmatpush1.msra.mxu0 %v824
    %1290 = vmatprep.subr.mxu0 %v827
    %1291 = vmatpush1.msra.mxu0 %v826
    %1292 = vmatprep.subr.mxu0 %v829
    %1293 = vmatpush1.msra.mxu0 %v828
    %1294 = vmatprep.subr.mxu0 %v831
    %1295 = vmatpush1.msra.mxu0 %v830
    %1296 = vmatprep.subr.mxu0 %v833
    %1297 = vmatpush1.msra.mxu0 %v832
    %1298 = vmatprep.subr.mxu0 %v835
    %1299 = vmatpush1.msra.mxu0 %v834
    %1300 = vmatprep.subr.mxu0 %v837
    %1301 = vmatpush1.msra.mxu0 %v836
    %1302 = vmatprep.subr.mxu0 %v839
    %1303 = vmatpush1.msra.mxu0 %v838
    %1304 = vmatprep.subr.mxu0 %v841
    %1305 = vmatpush1.msra.mxu0 %v840
    %1306 = vmatprep.subr.mxu0 %v843
    %1307 = vmatpush1.msra.mxu0 %v842
    %1308 = vmatprep.subr.mxu0 %v845
    %1309 = vmatpush1.msra.mxu0 %v844
    %1310 = vmatprep.subr.mxu0 %v847
    %1311 = vmatpush1.msra.mxu0 %v846
    %1312 = vmatprep.subr.mxu0 %v849
    %1313 = vmatpush1.msra.mxu0 %v848
    %1314 = vmatprep.subr.mxu0 %v851
    %1315 = vmatpush1.msra.mxu0 %v850
    %1316 = vmatprep.subr.mxu0 %v853
    %1317 = vmatpush1.msra.mxu0 %v852
    %1318 = vmatprep.subr.mxu0 %v855
    %1319 = vmatpush1.msra.mxu0 %v854
    %1320 = vmatprep.subr.mxu0 0.0
    %1321 = vmatpush1.msra.mxu0 0.0
    %1322 = vmatprep.subr.mxu0 0.0
    %1323 = vmatpush1.msra.mxu0 0.0
    %1324 = vmatprep.subr.mxu0 0.0
    %1325 = vmatpush1.msra.mxu0 0.0
    %1326 = vmatprep.subr.mxu0 0.0
    %1327 = vmatpush1.msra.mxu0 0.0
    %1328 = vmatprep.subr.mxu0 0.0
    %1329 = vmatpush1.msra.mxu0 0.0
    %1330 = vmatprep.subr.mxu0 0.0
    %1331 = vmatpush1.msra.mxu0 0.0
    %1332 = vmatprep.subr.mxu0 0.0
    %1333 = vmatpush1.msra.mxu0 0.0
    %1334 = vmatprep.subr.mxu0 0.0
    %1335 = vmatpush1.msra.mxu0 0.0
    %1336 = vmatprep.subr.mxu0 0.0
    %1337 = vmatpush1.msra.mxu0 0.0
    %1338 = vmatprep.subr.mxu0 0.0
    %1339 = vmatpush1.msra.mxu0 0.0
    %1340 = vmatprep.subr.mxu0 0.0
    %1341 = vmatpush1.msra.mxu0 0.0
    %1342 = vmatprep.subr.mxu0 0.0
    %1343 = vmatpush1.msra.mxu0 0.0
    %1344 = vmatprep.subr.mxu0 0.0
    %1345 = vmatpush1.msra.mxu0 0.0
    %1346 = vmatprep.subr.mxu0 0.0
    %1347 = vmatpush1.msra.mxu0 0.0
    %1348 = vmatprep.subr.mxu0 0.0
    %1349 = vmatpush1.msra.mxu0 0.0
    %1350 = vmatprep.subr.mxu0 0.0
    %1351 = vmatpush1.msra.mxu0 0.0
    %1352 = vmatprep.mubr.f32.mxu0 0.0
    %1353 = vmatmul.mubr.f32.gmra.mrb[0].mxu0 %v937
    %v1354 = vpop.f32.mrb[0].mxu0
    %v1355 = vadd.f32 0.0, %v1354
    %v1356 = vpop.f32.mrb[0].mxu0
    %v1357 = vadd.f32 0.0, %v1356
    %1358 = vmatprep.mubr.f32.mxu0 0.0
    %1359 = vmatmul.mubr.f32.gmra.mrb[0].mxu0 %v938
    %v1360 = vpop.f32.mrb[0].mxu0
    %v1361 = vadd.f32 0.0, %v1360
    %v1362 = vpop.f32.mrb[0].mxu0
    %v1363 = vadd.f32 0.0, %v1362
    %1364 = vdwg.mxu0
    %v1365 = vadd.f32 %v1284, %v1355
    %v1366 = vadd.f32 %v1285, %v1357
    %v1367 = vadd.f32 %v1286, %v1361
    %v1368 = vadd.f32 %v1287, %v1363
    %v1369 = vld [vmem:[#allocation2 + $0x14] sm:$0xff]
    %v1370 = vld [vmem:[#allocation2 + $0x1c] sm:$0xf]
    %1371 = vmatprep.subr.mxu0 %v941
    %1372 = vmatpush1.msra.mxu0 %v940
    %1373 = vmatprep.subr.mxu0 %v943
    %1374 = vmatpush1.msra.mxu0 %v942
    %1375 = vmatprep.subr.mxu0 %v945
    %1376 = vmatpush1.msra.mxu0 %v944
    %1377 = vmatprep.subr.mxu0 %v947
    %1378 = vmatpush1.msra.mxu0 %v946
    %1379 = vmatprep.subr.mxu0 %v949
    %1380 = vmatpush1.msra.mxu0 %v948
    %1381 = vmatprep.subr.mxu0 %v951
    %1382 = vmatpush1.msra.mxu0 %v950
    %1383 = vmatprep.subr.mxu0 %v953
    %1384 = vmatpush1.msra.mxu0 %v952
    %1385 = vmatprep.subr.mxu0 %v955
    %1386 = vmatpush1.msra.mxu0 %v954
    %1387 = vmatprep.subr.mxu0 %v957
    %1388 = vmatpush1.msra.mxu0 %v956
    %1389 = vmatprep.subr.mxu0 %v959
    %1390 = vmatpush1.msra.mxu0 %v958
    %1391 = vmatprep.subr.mxu0 %v961
    %1392 = vmatpush1.msra.mxu0 %v960
    %1393 = vmatprep.subr.mxu0 %v963
    %1394 = vmatpush1.msra.mxu0 %v962
    %1395 = vmatprep.subr.mxu0 %v965
    %1396 = vmatpush1.msra.mxu0 %v964
    %1397 = vmatprep.subr.mxu0 %v967
    %1398 = vmatpush1.msra.mxu0 %v966
    %1399 = vmatprep.subr.mxu0 %v969
    %1400 = vmatpush1.msra.mxu0 %v968
    %1401 = vmatprep.subr.mxu0 %v971
    %1402 = vmatpush1.msra.mxu0 %v970
    %1403 = vmatprep.subr.mxu0 0.0
    %1404 = vmatpush1.msra.mxu0 0.0
    %1405 = vmatprep.subr.mxu0 0.0
    %1406 = vmatpush1.msra.mxu0 0.0
    %1407 = vmatprep.subr.mxu0 0.0
    %1408 = vmatpush1.msra.mxu0 0.0
    %1409 = vmatprep.subr.mxu0 0.0
    %1410 = vmatpush1.msra.mxu0 0.0
    %1411 = vmatprep.subr.mxu0 0.0
    %1412 = vmatpush1.msra.mxu0 0.0
    %1413 = vmatprep.subr.mxu0 0.0
    %1414 = vmatpush1.msra.mxu0 0.0
    %1415 = vmatprep.subr.mxu0 0.0
    %1416 = vmatpush1.msra.mxu0 0.0
    %1417 = vmatprep.subr.mxu0 0.0
    %1418 = vmatpush1.msra.mxu0 0.0
    %1419 = vmatprep.subr.mxu0 0.0
    %1420 = vmatpush1.msra.mxu0 0.0
    %1421 = vmatprep.subr.mxu0 0.0
    %1422 = vmatpush1.msra.mxu0 0.0
    %1423 = vmatprep.subr.mxu0 0.0
    %1424 = vmatpush1.msra.mxu0 0.0
    %1425 = vmatprep.subr.mxu0 0.0
    %1426 = vmatpush1.msra.mxu0 0.0
    %1427 = vmatprep.subr.mxu0 0.0
    %1428 = vmatpush1.msra.mxu0 0.0
    %1429 = vmatprep.subr.mxu0 0.0
    %1430 = vmatpush1.msra.mxu0 0.0
    %1431 = vmatprep.subr.mxu0 0.0
    %1432 = vmatpush1.msra.mxu0 0.0
    %1433 = vmatprep.subr.mxu0 0.0
    %1434 = vmatpush1.msra.mxu0 0.0
    %1435 = vmatprep.mubr.f32.mxu0 0.0
    %1436 = vmatmul.mubr.f32.gmra.mrb[0].mxu0 %v1369
    %v1437 = vpop.f32.mrb[0].mxu0
    %v1438 = vadd.f32 0.0, %v1437
    %v1439 = vpop.f32.mrb[0].mxu0
    %v1440 = vadd.f32 0.0, %v1439
    %1441 = vmatprep.mubr.f32.mxu0 0.0
    %1442 = vmatmul.mubr.f32.gmra.mrb[0].mxu0 %v1370
    %v1443 = vpop.f32.mrb[0].mxu0
    %v1444 = vadd.f32 0.0, %v1443
    %v1445 = vpop.f32.mrb[0].mxu0
    %v1446 = vadd.f32 0.0, %v1445
    %1447 = vdwg.mxu0
    %v1448 = vadd.f32 %v1365, %v1438
    %v1449 = vadd.f32 %v1366, %v1440
    %v1450 = vadd.f32 %v1367, %v1444
    %v1451 = vadd.f32 %v1368, %v1446
    %v1452 = vmax.f32 %v1049, %v1050
    %v1453 = vmax.f32 %v1051, %v1052
    %v1454 = vmax.f32 %v1448, %v1449
    %v1455 = vmax.f32 %v1450, %v1451
    %v1456 = vmax.f32 %v1452, %v1454
    %v1457 = vmax.f32 %v1453, %v1455
    %v1458 = vld [vmem:[%s4] sm:$0x1]
    %v1460 = vlaneseq
    %v1461 = vshrl.u32 %v1460, 7
    %v1462 = vsub.s32 0, %v1461
    %v1463 = vrot.slane %v1458, %v1462
    %v1465 = vadd.f32 %v1456, %v1463
    %v1466 = vadd.f32 %v1457, %v1463
    %v1467 = vmax.f32 %v1465, 0.0
    %v1468 = vmax.f32 %v1466, 0.0
    %1469 = vst [vmem:[#allocation3] sm:$0xff] %v1467
    %1470 = vst [vmem:[#allocation3 + $0x8] sm:$0xf] %v1468
    %v1471 = vld [vmem:[#allocation3] sm:$0x3]
    %v1472 = vld [vmem:[%s5] sm:$0xff]
    %v1473 = vld [vmem:[%s5 + $0x8] sm:$0xff]
    %v1474 = vld [vmem:[%s5 + $0x10] sm:$0xff]
    %v1475 = vld [vmem:[%s5 + $0x18] sm:$0xff]
    %v1476 = vld [vmem:[%s5 + $0x20] sm:$0xff]
    %v1477 = vld [vmem:[%s5 + $0x28] sm:$0xff]
    %v1478 = vld [vmem:[%s5 + $0x30] sm:$0xff]
    %v1479 = vld [vmem:[%s5 + $0x38] sm:$0xff]
    %v1480 = vld [vmem:[%s5 + $0x40] sm:$0xff]
    %v1481 = vld [vmem:[%s5 + $0x48] sm:$0xff]
    %v1482 = vld [vmem:[%s5 + $0x50] sm:$0xff]
    %v1483 = vld [vmem:[%s5 + $0x58] sm:$0xff]
    %v1484 = vld [vmem:[%s5 + $0x60] sm:$0xff]
    %v1485 = vld [vmem:[%s5 + $0x68] sm:$0xff]
    %v1486 = vld [vmem:[%s5 + $0x70] sm:$0xff]
    %v1487 = vld [vmem:[%s5 + $0x78] sm:$0xff]
    %v1488 = vld [vmem:[#allocation3 + $0x2] sm:$0x3]
    %s1489 = scalar_lea.vmem %s5, 128
    %v1490 = vld [vmem:[%s1489] sm:$0xff]
    %v1491 = vld [vmem:[%s1489 + $0x8] sm:$0xff]
    %v1492 = vld [vmem:[%s1489 + $0x10] sm:$0xff]
    %v1493 = vld [vmem:[%s1489 + $0x18] sm:$0xff]
    %v1494 = vld [vmem:[%s1489 + $0x20] sm:$0xff]
    %v1495 = vld [vmem:[%s1489 + $0x28] sm:$0xff]
    %v1496 = vld [vmem:[%s1489 + $0x30] sm:$0xff]
    %v1497 = vld [vmem:[%s1489 + $0x38] sm:$0xff]
    %v1498 = vld [vmem:[%s1489 + $0x40] sm:$0xff]
    %v1499 = vld [vmem:[%s1489 + $0x48] sm:$0xff]
    %v1500 = vld [vmem:[%s1489 + $0x50] sm:$0xff]
    %v1501 = vld [vmem:[%s1489 + $0x58] sm:$0xff]
    %v1502 = vld [vmem:[%s1489 + $0x60] sm:$0xff]
    %v1503 = vld [vmem:[%s1489 + $0x68] sm:$0xff]
    %v1504 = vld [vmem:[%s1489 + $0x70] sm:$0xff]
    %v1505 = vld [vmem:[%s1489 + $0x78] sm:$0xff]
    %1506 = vmatprep.subr.mxu0 0.0
    %1507 = vmatpush1.msra.mxu0 %v1490
    %1508 = vmatprep.subr.mxu0 0.0
    %1509 = vmatpush1.msra.mxu0 %v1491
    %1510 = vmatprep.subr.mxu0 0.0
    %1511 = vmatpush1.msra.mxu0 %v1492
    %1512 = vmatprep.subr.mxu0 0.0
    %1513 = vmatpush1.msra.mxu0 %v1493
    %1514 = vmatprep.subr.mxu0 0.0
    %1515 = vmatpush1.msra.mxu0 %v1494
    %1516 = vmatprep.subr.mxu0 0.0
    %1517 = vmatpush1.msra.mxu0 %v1495
    %1518 = vmatprep.subr.mxu0 0.0
    %1519 = vmatpush1.msra.mxu0 %v1496
    %1520 = vmatprep.subr.mxu0 0.0
    %1521 = vmatpush1.msra.mxu0 %v1497
    %1522 = vmatprep.subr.mxu0 0.0
    %1523 = vmatpush1.msra.mxu0 %v1498
    %1524 = vmatprep.subr.mxu0 0.0
    %1525 = vmatpush1.msra.mxu0 %v1499
    %1526 = vmatprep.subr.mxu0 0.0
    %1527 = vmatpush1.msra.mxu0 %v1500
    %1528 = vmatprep.subr.mxu0 0.0
    %1529 = vmatpush1.msra.mxu0 %v1501
    %1530 = vmatprep.subr.mxu0 0.0
    %1531 = vmatpush1.msra.mxu0 %v1502
    %1532 = vmatprep.subr.mxu0 0.0
    %1533 = vmatpush1.msra.mxu0 %v1503
    %1534 = vmatprep.subr.mxu0 0.0
    %1535 = vmatpush1.msra.mxu0 %v1504
    %1536 = vmatprep.subr.mxu0 0.0
    %1537 = vmatpush1.msra.mxu0 %v1505
    %1538 = vmatprep.subr.mxu0 0.0
    %1539 = vmatpush1.msra.mxu0 0.0
    %1540 = vmatprep.subr.mxu0 0.0
    %1541 = vmatpush1.msra.mxu0 0.0
    %1542 = vmatprep.subr.mxu0 0.0
    %1543 = vmatpush1.msra.mxu0 0.0
    %1544 = vmatprep.subr.mxu0 0.0
    %1545 = vmatpush1.msra.mxu0 0.0
    %1546 = vmatprep.subr.mxu0 0.0
    %1547 = vmatpush1.msra.mxu0 0.0
    %1548 = vmatprep.subr.mxu0 0.0
    %1549 = vmatpush1.msra.mxu0 0.0
    %1550 = vmatprep.subr.mxu0 0.0
    %1551 = vmatpush1.msra.mxu0 0.0
    %1552 = vmatprep.subr.mxu0 0.0
    %1553 = vmatpush1.msra.mxu0 0.0
    %1554 = vmatprep.subr.mxu0 0.0
    %1555 = vmatpush1.msra.mxu0 0.0
    %1556 = vmatprep.subr.mxu0 0.0
    %1557 = vmatpush1.msra.mxu0 0.0
    %1558 = vmatprep.subr.mxu0 0.0
    %1559 = vmatpush1.msra.mxu0 0.0
    %1560 = vmatprep.subr.mxu0 0.0
    %1561 = vmatpush1.msra.mxu0 0.0
    %1562 = vmatprep.subr.mxu0 0.0
    %1563 = vmatpush1.msra.mxu0 0.0
    %1564 = vmatprep.subr.mxu0 0.0
    %1565 = vmatpush1.msra.mxu0 0.0
    %1566 = vmatprep.subr.mxu0 0.0
    %1567 = vmatpush1.msra.mxu0 0.0
    %1568 = vmatprep.subr.mxu0 0.0
    %1569 = vmatpush1.msra.mxu0 0.0
    %1570 = vmatprep.mubr.f32.mxu0 0.0
    %1571 = vmatmul.mubr.f32.gmra.mrb[0].mxu0 %v1488
    %v1572 = vpop.f32.mrb[0].mxu0
    %v1573 = vadd.f32 0.0, %v1572
    %v1574 = vpop.f32.mrb[0].mxu0
    %1575 = vdwg.mxu0
    %1576 = vmatprep.subr.mxu0 0.0
    %1577 = vmatpush1.msra.mxu0 %v1472
    %1578 = vmatprep.subr.mxu0 0.0
    %1579 = vmatpush1.msra.mxu0 %v1473
    %1580 = vmatprep.subr.mxu0 0.0
    %1581 = vmatpush1.msra.mxu0 %v1474
    %1582 = vmatprep.subr.mxu0 0.0
    %1583 = vmatpush1.msra.mxu0 %v1475
    %1584 = vmatprep.subr.mxu0 0.0
    %1585 = vmatpush1.msra.mxu0 %v1476
    %1586 = vmatprep.subr.mxu0 0.0
    %1587 = vmatpush1.msra.mxu0 %v1477
    %1588 = vmatprep.subr.mxu0 0.0
    %1589 = vmatpush1.msra.mxu0 %v1478
    %1590 = vmatprep.subr.mxu0 0.0
    %1591 = vmatpush1.msra.mxu0 %v1479
    %1592 = vmatprep.subr.mxu0 0.0
    %1593 = vmatpush1.msra.mxu0 %v1480
    %1594 = vmatprep.subr.mxu0 0.0
    %1595 = vmatpush1.msra.mxu0 %v1481
    %1596 = vmatprep.subr.mxu0 0.0
    %1597 = vmatpush1.msra.mxu0 %v1482
    %1598 = vmatprep.subr.mxu0 0.0
    %1599 = vmatpush1.msra.mxu0 %v1483
    %1600 = vmatprep.subr.mxu0 0.0
    %1601 = vmatpush1.msra.mxu0 %v1484
    %1602 = vmatprep.subr.mxu0 0.0
    %1603 = vmatpush1.msra.mxu0 %v1485
    %1604 = vmatprep.subr.mxu0 0.0
    %1605 = vmatpush1.msra.mxu0 %v1486
    %1606 = vmatprep.subr.mxu0 0.0
    %1607 = vmatpush1.msra.mxu0 %v1487
    %1608 = vmatprep.subr.mxu0 0.0
    %1609 = vmatpush1.msra.mxu0 0.0
    %1610 = vmatprep.subr.mxu0 0.0
    %1611 = vmatpush1.msra.mxu0 0.0
    %1612 = vmatprep.subr.mxu0 0.0
    %1613 = vmatpush1.msra.mxu0 0.0
    %1614 = vmatprep.subr.mxu0 0.0
    %1615 = vmatpush1.msra.mxu0 0.0
    %1616 = vmatprep.subr.mxu0 0.0
    %1617 = vmatpush1.msra.mxu0 0.0
    %1618 = vmatprep.subr.mxu0 0.0
    %1619 = vmatpush1.msra.mxu0 0.0
    %1620 = vmatprep.subr.mxu0 0.0
    %1621 = vmatpush1.msra.mxu0 0.0
    %1622 = vmatprep.subr.mxu0 0.0
    %1623 = vmatpush1.msra.mxu0 0.0
    %1624 = vmatprep.subr.mxu0 0.0
    %1625 = vmatpush1.msra.mxu0 0.0
    %1626 = vmatprep.subr.mxu0 0.0
    %1627 = vmatpush1.msra.mxu0 0.0
    %1628 = vmatprep.subr.mxu0 0.0
    %1629 = vmatpush1.msra.mxu0 0.0
    %1630 = vmatprep.subr.mxu0 0.0
    %1631 = vmatpush1.msra.mxu0 0.0
    %1632 = vmatprep.subr.mxu0 0.0
    %1633 = vmatpush1.msra.mxu0 0.0
    %1634 = vmatprep.subr.mxu0 0.0
    %1635 = vmatpush1.msra.mxu0 0.0
    %1636 = vmatprep.subr.mxu0 0.0
    %1637 = vmatpush1.msra.mxu0 0.0
    %1638 = vmatprep.subr.mxu0 0.0
    %1639 = vmatpush1.msra.mxu0 0.0
    %1640 = vmatprep.mubr.f32.mxu0 0.0
    %1641 = vmatmul.mubr.f32.gmra.mrb[0].mxu0 %v1471
    %v1642 = vpop.f32.mrb[0].mxu0
    %v1643 = vadd.f32 %v1573, %v1642
    %v1644 = vpop.f32.mrb[0].mxu0
    %1645 = vdwg.mxu0
    %v1646 = vld [vmem:[#allocation3 + $0x4] sm:$0x3]
    %s1647 = scalar_lea.vmem %s5, 256
    %v1648 = vld [vmem:[%s1647] sm:$0xff]
    %v1649 = vld [vmem:[%s1647 + $0x8] sm:$0xff]
    %v1650 = vld [vmem:[%s1647 + $0x10] sm:$0xff]
    %v1651 = vld [vmem:[%s1647 + $0x18] sm:$0xff]
    %v1652 = vld [vmem:[%s1647 + $0x20] sm:$0xff]
    %v1653 = vld [vmem:[%s1647 + $0x28] sm:$0xff]
    %v1654 = vld [vmem:[%s1647 + $0x30] sm:$0xff]
    %v1655 = vld [vmem:[%s1647 + $0x38] sm:$0xff]
    %v1656 = vld [vmem:[%s1647 + $0x40] sm:$0xff]
    %v1657 = vld [vmem:[%s1647 + $0x48] sm:$0xff]
    %v1658 = vld [vmem:[%s1647 + $0x50] sm:$0xff]
    %v1659 = vld [vmem:[%s1647 + $0x58] sm:$0xff]
    %v1660 = vld [vmem:[%s1647 + $0x60] sm:$0xff]
    %v1661 = vld [vmem:[%s1647 + $0x68] sm:$0xff]
    %v1662 = vld [vmem:[%s1647 + $0x70] sm:$0xff]
    %v1663 = vld [vmem:[%s1647 + $0x78] sm:$0xff]
    %1664 = vmatprep.subr.mxu0 0.0
    %1665 = vmatpush1.msra.mxu0 %v1648
    %1666 = vmatprep.subr.mxu0 0.0
    %1667 = vmatpush1.msra.mxu0 %v1649
    %1668 = vmatprep.subr.mxu0 0.0
    %1669 = vmatpush1.msra.mxu0 %v1650
    %1670 = vmatprep.subr.mxu0 0.0
    %1671 = vmatpush1.msra.mxu0 %v1651
    %1672 = vmatprep.subr.mxu0 0.0
    %1673 = vmatpush1.msra.mxu0 %v1652
    %1674 = vmatprep.subr.mxu0 0.0
    %1675 = vmatpush1.msra.mxu0 %v1653
    %1676 = vmatprep.subr.mxu0 0.0
    %1677 = vmatpush1.msra.mxu0 %v1654
    %1678 = vmatprep.subr.mxu0 0.0
    %1679 = vmatpush1.msra.mxu0 %v1655
    %1680 = vmatprep.subr.mxu0 0.0
    %1681 = vmatpush1.msra.mxu0 %v1656
    %1682 = vmatprep.subr.mxu0 0.0
    %1683 = vmatpush1.msra.mxu0 %v1657
    %1684 = vmatprep.subr.mxu0 0.0
    %1685 = vmatpush1.msra.mxu0 %v1658
    %1686 = vmatprep.subr.mxu0 0.0
    %1687 = vmatpush1.msra.mxu0 %v1659
    %1688 = vmatprep.subr.mxu0 0.0
    %1689 = vmatpush1.msra.mxu0 %v1660
    %1690 = vmatprep.subr.mxu0 0.0
    %1691 = vmatpush1.msra.mxu0 %v1661
    %1692 = vmatprep.subr.mxu0 0.0
    %1693 = vmatpush1.msra.mxu0 %v1662
    %1694 = vmatprep.subr.mxu0 0.0
    %1695 = vmatpush1.msra.mxu0 %v1663
    %1696 = vmatprep.subr.mxu0 0.0
    %1697 = vmatpush1.msra.mxu0 0.0
    %1698 = vmatprep.subr.mxu0 0.0
    %1699 = vmatpush1.msra.mxu0 0.0
    %1700 = vmatprep.subr.mxu0 0.0
    %1701 = vmatpush1.msra.mxu0 0.0
    %1702 = vmatprep.subr.mxu0 0.0
    %1703 = vmatpush1.msra.mxu0 0.0
    %1704 = vmatprep.subr.mxu0 0.0
    %1705 = vmatpush1.msra.mxu0 0.0
    %1706 = vmatprep.subr.mxu0 0.0
    %1707 = vmatpush1.msra.mxu0 0.0
    %1708 = vmatprep.subr.mxu0 0.0
    %1709 = vmatpush1.msra.mxu0 0.0
    %1710 = vmatprep.subr.mxu0 0.0
    %1711 = vmatpush1.msra.mxu0 0.0
    %1712 = vmatprep.subr.mxu0 0.0
    %1713 = vmatpush1.msra.mxu0 0.0
    %1714 = vmatprep.subr.mxu0 0.0
    %1715 = vmatpush1.msra.mxu0 0.0
    %1716 = vmatprep.subr.mxu0 0.0
    %1717 = vmatpush1.msra.mxu0 0.0
    %1718 = vmatprep.subr.mxu0 0.0
    %1719 = vmatpush1.msra.mxu0 0.0
    %1720 = vmatprep.subr.mxu0 0.0
    %1721 = vmatpush1.msra.mxu0 0.0
    %1722 = vmatprep.subr.mxu0 0.0
    %1723 = vmatpush1.msra.mxu0 0.0
    %1724 = vmatprep.subr.mxu0 0.0
    %1725 = vmatpush1.msra.mxu0 0.0
    %1726 = vmatprep.subr.mxu0 0.0
    %1727 = vmatpush1.msra.mxu0 0.0
    %1728 = vmatprep.mubr.f32.mxu0 0.0
    %1729 = vmatmul.mubr.f32.gmra.mrb[0].mxu0 %v1646
    %v1730 = vpop.f32.mrb[0].mxu0
    %v1731 = vadd.f32 0.0, %v1730
    %v1732 = vpop.f32.mrb[0].mxu0
    %1733 = vdwg.mxu0
    %v1734 = vadd.f32 %v1643, %v1731
    %v1735 = vld [vmem:[#allocation3 + $0x6] sm:$0x3]
    %s1736 = scalar_lea.vmem %s5, 384
    %v1737 = vld [vmem:[%s1736] sm:$0xff]
    %v1738 = vld [vmem:[%s1736 + $0x8] sm:$0xff]
    %v1739 = vld [vmem:[%s1736 + $0x10] sm:$0xff]
    %v1740 = vld [vmem:[%s1736 + $0x18] sm:$0xff]
    %v1741 = vld [vmem:[%s1736 + $0x20] sm:$0xff]
    %v1742 = vld [vmem:[%s1736 + $0x28] sm:$0xff]
    %v1743 = vld [vmem:[%s1736 + $0x30] sm:$0xff]
    %v1744 = vld [vmem:[%s1736 + $0x38] sm:$0xff]
    %v1745 = vld [vmem:[%s1736 + $0x40] sm:$0xff]
    %v1746 = vld [vmem:[%s1736 + $0x48] sm:$0xff]
    %v1747 = vld [vmem:[%s1736 + $0x50] sm:$0xff]
    %v1748 = vld [vmem:[%s1736 + $0x58] sm:$0xff]
    %v1749 = vld [vmem:[%s1736 + $0x60] sm:$0xff]
    %v1750 = vld [vmem:[%s1736 + $0x68] sm:$0xff]
    %v1751 = vld [vmem:[%s1736 + $0x70] sm:$0xff]
    %v1752 = vld [vmem:[%s1736 + $0x78] sm:$0xff]
    %1753 = vmatprep.subr.mxu0 0.0
    %1754 = vmatpush1.msra.mxu0 %v1737
    %1755 = vmatprep.subr.mxu0 0.0
    %1756 = vmatpush1.msra.mxu0 %v1738
    %1757 = vmatprep.subr.mxu0 0.0
    %1758 = vmatpush1.msra.mxu0 %v1739
    %1759 = vmatprep.subr.mxu0 0.0
    %1760 = vmatpush1.msra.mxu0 %v1740
    %1761 = vmatprep.subr.mxu0 0.0
    %1762 = vmatpush1.msra.mxu0 %v1741
    %1763 = vmatprep.subr.mxu0 0.0
    %1764 = vmatpush1.msra.mxu0 %v1742
    %1765 = vmatprep.subr.mxu0 0.0
    %1766 = vmatpush1.msra.mxu0 %v1743
    %1767 = vmatprep.subr.mxu0 0.0
    %1768 = vmatpush1.msra.mxu0 %v1744
    %1769 = vmatprep.subr.mxu0 0.0
    %1770 = vmatpush1.msra.mxu0 %v1745
    %1771 = vmatprep.subr.mxu0 0.0
    %1772 = vmatpush1.msra.mxu0 %v1746
    %1773 = vmatprep.subr.mxu0 0.0
    %1774 = vmatpush1.msra.mxu0 %v1747
    %1775 = vmatprep.subr.mxu0 0.0
    %1776 = vmatpush1.msra.mxu0 %v1748
    %1777 = vmatprep.subr.mxu0 0.0
    %1778 = vmatpush1.msra.mxu0 %v1749
    %1779 = vmatprep.subr.mxu0 0.0
    %1780 = vmatpush1.msra.mxu0 %v1750
    %1781 = vmatprep.subr.mxu0 0.0
    %1782 = vmatpush1.msra.mxu0 %v1751
    %1783 = vmatprep.subr.mxu0 0.0
    %1784 = vmatpush1.msra.mxu0 %v1752
    %1785 = vmatprep.subr.mxu0 0.0
    %1786 = vmatpush1.msra.mxu0 0.0
    %1787 = vmatprep.subr.mxu0 0.0
    %1788 = vmatpush1.msra.mxu0 0.0
    %1789 = vmatprep.subr.mxu0 0.0
    %1790 = vmatpush1.msra.mxu0 0.0
    %1791 = vmatprep.subr.mxu0 0.0
    %1792 = vmatpush1.msra.mxu0 0.0
    %1793 = vmatprep.subr.mxu0 0.0
    %1794 = vmatpush1.msra.mxu0 0.0
    %1795 = vmatprep.subr.mxu0 0.0
    %1796 = vmatpush1.msra.mxu0 0.0
    %1797 = vmatprep.subr.mxu0 0.0
    %1798 = vmatpush1.msra.mxu0 0.0
    %1799 = vmatprep.subr.mxu0 0.0
    %1800 = vmatpush1.msra.mxu0 0.0
    %1801 = vmatprep.subr.mxu0 0.0
    %1802 = vmatpush1.msra.mxu0 0.0
    %1803 = vmatprep.subr.mxu0 0.0
    %1804 = vmatpush1.msra.mxu0 0.0
    %1805 = vmatprep.subr.mxu0 0.0
    %1806 = vmatpush1.msra.mxu0 0.0
    %1807 = vmatprep.subr.mxu0 0.0
    %1808 = vmatpush1.msra.mxu0 0.0
    %1809 = vmatprep.subr.mxu0 0.0
    %1810 = vmatpush1.msra.mxu0 0.0
    %1811 = vmatprep.subr.mxu0 0.0
    %1812 = vmatpush1.msra.mxu0 0.0
    %1813 = vmatprep.subr.mxu0 0.0
    %1814 = vmatpush1.msra.mxu0 0.0
    %1815 = vmatprep.subr.mxu0 0.0
    %1816 = vmatpush1.msra.mxu0 0.0
    %1817 = vmatprep.mubr.f32.mxu0 0.0
    %1818 = vmatmul.mubr.f32.gmra.mrb[0].mxu0 %v1735
    %v1819 = vpop.f32.mrb[0].mxu0
    %v1820 = vadd.f32 0.0, %v1819
    %v1821 = vpop.f32.mrb[0].mxu0
    %1822 = vdwg.mxu0
    %v1823 = vadd.f32 %v1734, %v1820
    %v1824 = vld [vmem:[#allocation3 + $0x8] sm:$0x3]
    %s1825 = scalar_lea.vmem %s5, 512
    %v1826 = vld [vmem:[%s1825] sm:$0xff]
    %v1827 = vld [vmem:[%s1825 + $0x8] sm:$0xff]
    %v1828 = vld [vmem:[%s1825 + $0x10] sm:$0xff]
    %v1829 = vld [vmem:[%s1825 + $0x18] sm:$0xff]
    %v1830 = vld [vmem:[%s1825 + $0x20] sm:$0xff]
    %v1831 = vld [vmem:[%s1825 + $0x28] sm:$0xff]
    %v1832 = vld [vmem:[%s1825 + $0x30] sm:$0xff]
    %v1833 = vld [vmem:[%s1825 + $0x38] sm:$0xff]
    %v1834 = vld [vmem:[%s1825 + $0x40] sm:$0xff]
    %v1835 = vld [vmem:[%s1825 + $0x48] sm:$0xff]
    %v1836 = vld [vmem:[%s1825 + $0x50] sm:$0xff]
    %v1837 = vld [vmem:[%s1825 + $0x58] sm:$0xff]
    %v1838 = vld [vmem:[%s1825 + $0x60] sm:$0xff]
    %v1839 = vld [vmem:[%s1825 + $0x68] sm:$0xff]
    %v1840 = vld [vmem:[%s1825 + $0x70] sm:$0xff]
    %v1841 = vld [vmem:[%s1825 + $0x78] sm:$0xff]
    %1842 = vmatprep.subr.mxu0 0.0
    %1843 = vmatpush1.msra.mxu0 %v1826
    %1844 = vmatprep.subr.mxu0 0.0
    %1845 = vmatpush1.msra.mxu0 %v1827
    %1846 = vmatprep.subr.mxu0 0.0
    %1847 = vmatpush1.msra.mxu0 %v1828
    %1848 = vmatprep.subr.mxu0 0.0
    %1849 = vmatpush1.msra.mxu0 %v1829
    %1850 = vmatprep.subr.mxu0 0.0
    %1851 = vmatpush1.msra.mxu0 %v1830
    %1852 = vmatprep.subr.mxu0 0.0
    %1853 = vmatpush1.msra.mxu0 %v1831
    %1854 = vmatprep.subr.mxu0 0.0
    %1855 = vmatpush1.msra.mxu0 %v1832
    %1856 = vmatprep.subr.mxu0 0.0
    %1857 = vmatpush1.msra.mxu0 %v1833
    %1858 = vmatprep.subr.mxu0 0.0
    %1859 = vmatpush1.msra.mxu0 %v1834
    %1860 = vmatprep.subr.mxu0 0.0
    %1861 = vmatpush1.msra.mxu0 %v1835
    %1862 = vmatprep.subr.mxu0 0.0
    %1863 = vmatpush1.msra.mxu0 %v1836
    %1864 = vmatprep.subr.mxu0 0.0
    %1865 = vmatpush1.msra.mxu0 %v1837
    %1866 = vmatprep.subr.mxu0 0.0
    %1867 = vmatpush1.msra.mxu0 %v1838
    %1868 = vmatprep.subr.mxu0 0.0
    %1869 = vmatpush1.msra.mxu0 %v1839
    %1870 = vmatprep.subr.mxu0 0.0
    %1871 = vmatpush1.msra.mxu0 %v1840
    %1872 = vmatprep.subr.mxu0 0.0
    %1873 = vmatpush1.msra.mxu0 %v1841
    %1874 = vmatprep.subr.mxu0 0.0
    %1875 = vmatpush1.msra.mxu0 0.0
    %1876 = vmatprep.subr.mxu0 0.0
    %1877 = vmatpush1.msra.mxu0 0.0
    %1878 = vmatprep.subr.mxu0 0.0
    %1879 = vmatpush1.msra.mxu0 0.0
    %1880 = vmatprep.subr.mxu0 0.0
    %1881 = vmatpush1.msra.mxu0 0.0
    %1882 = vmatprep.subr.mxu0 0.0
    %1883 = vmatpush1.msra.mxu0 0.0
    %1884 = vmatprep.subr.mxu0 0.0
    %1885 = vmatpush1.msra.mxu0 0.0
    %1886 = vmatprep.subr.mxu0 0.0
    %1887 = vmatpush1.msra.mxu0 0.0
    %1888 = vmatprep.subr.mxu0 0.0
    %1889 = vmatpush1.msra.mxu0 0.0
    %1890 = vmatprep.subr.mxu0 0.0
    %1891 = vmatpush1.msra.mxu0 0.0
    %1892 = vmatprep.subr.mxu0 0.0
    %1893 = vmatpush1.msra.mxu0 0.0
    %1894 = vmatprep.subr.mxu0 0.0
    %1895 = vmatpush1.msra.mxu0 0.0
    %1896 = vmatprep.subr.mxu0 0.0
    %1897 = vmatpush1.msra.mxu0 0.0
    %1898 = vmatprep.subr.mxu0 0.0
    %1899 = vmatpush1.msra.mxu0 0.0
    %1900 = vmatprep.subr.mxu0 0.0
    %1901 = vmatpush1.msra.mxu0 0.0
    %1902 = vmatprep.subr.mxu0 0.0
    %1903 = vmatpush1.msra.mxu0 0.0
    %1904 = vmatprep.subr.mxu0 0.0
    %1905 = vmatpush1.msra.mxu0 0.0
    %1906 = vmatprep.mubr.f32.mxu0 0.0
    %1907 = vmatmul.mubr.f32.gmra.mrb[0].mxu0 %v1824
    %v1908 = vpop.f32.mrb[0].mxu0
    %v1909 = vadd.f32 0.0, %v1908
    %v1910 = vpop.f32.mrb[0].mxu0
    %1911 = vdwg.mxu0
    %v1912 = vadd.f32 %v1823, %v1909
    %v1913 = vld [vmem:[#allocation3 + $0xa] sm:$0x3]
    %s1914 = scalar_lea.vmem %s5, 640
    %v1915 = vld [vmem:[%s1914] sm:$0xff]
    %v1916 = vld [vmem:[%s1914 + $0x8] sm:$0xff]
    %v1917 = vld [vmem:[%s1914 + $0x10] sm:$0xff]
    %v1918 = vld [vmem:[%s1914 + $0x18] sm:$0xff]
    %v1919 = vld [vmem:[%s1914 + $0x20] sm:$0xff]
    %v1920 = vld [vmem:[%s1914 + $0x28] sm:$0xff]
    %v1921 = vld [vmem:[%s1914 + $0x30] sm:$0xff]
    %v1922 = vld [vmem:[%s1914 + $0x38] sm:$0xff]
    %v1923 = vld [vmem:[%s1914 + $0x40] sm:$0xff]
    %v1924 = vld [vmem:[%s1914 + $0x48] sm:$0xff]
    %v1925 = vld [vmem:[%s1914 + $0x50] sm:$0xff]
    %v1926 = vld [vmem:[%s1914 + $0x58] sm:$0xff]
    %v1927 = vld [vmem:[%s1914 + $0x60] sm:$0xff]
    %v1928 = vld [vmem:[%s1914 + $0x68] sm:$0xff]
    %v1929 = vld [vmem:[%s1914 + $0x70] sm:$0xff]
    %v1930 = vld [vmem:[%s1914 + $0x78] sm:$0xff]
    %1931 = vmatprep.subr.mxu0 0.0
    %1932 = vmatpush1.msra.mxu0 %v1915
    %1933 = vmatprep.subr.mxu0 0.0
    %1934 = vmatpush1.msra.mxu0 %v1916
    %1935 = vmatprep.subr.mxu0 0.0
    %1936 = vmatpush1.msra.mxu0 %v1917
    %1937 = vmatprep.subr.mxu0 0.0
    %1938 = vmatpush1.msra.mxu0 %v1918
    %1939 = vmatprep.subr.mxu0 0.0
    %1940 = vmatpush1.msra.mxu0 %v1919
    %1941 = vmatprep.subr.mxu0 0.0
    %1942 = vmatpush1.msra.mxu0 %v1920
    %1943 = vmatprep.subr.mxu0 0.0
    %1944 = vmatpush1.msra.mxu0 %v1921
    %1945 = vmatprep.subr.mxu0 0.0
    %1946 = vmatpush1.msra.mxu0 %v1922
    %1947 = vmatprep.subr.mxu0 0.0
    %1948 = vmatpush1.msra.mxu0 %v1923
    %1949 = vmatprep.subr.mxu0 0.0
    %1950 = vmatpush1.msra.mxu0 %v1924
    %1951 = vmatprep.subr.mxu0 0.0
    %1952 = vmatpush1.msra.mxu0 %v1925
    %1953 = vmatprep.subr.mxu0 0.0
    %1954 = vmatpush1.msra.mxu0 %v1926
    %1955 = vmatprep.subr.mxu0 0.0
    %1956 = vmatpush1.msra.mxu0 %v1927
    %1957 = vmatprep.subr.mxu0 0.0
    %1958 = vmatpush1.msra.mxu0 %v1928
    %1959 = vmatprep.subr.mxu0 0.0
    %1960 = vmatpush1.msra.mxu0 %v1929
    %1961 = vmatprep.subr.mxu0 0.0
    %1962 = vmatpush1.msra.mxu0 %v1930
    %1963 = vmatprep.subr.mxu0 0.0
    %1964 = vmatpush1.msra.mxu0 0.0
    %1965 = vmatprep.subr.mxu0 0.0
    %1966 = vmatpush1.msra.mxu0 0.0
    %1967 = vmatprep.subr.mxu0 0.0
    %1968 = vmatpush1.msra.mxu0 0.0
    %1969 = vmatprep.subr.mxu0 0.0
    %1970 = vmatpush1.msra.mxu0 0.0
    %1971 = vmatprep.subr.mxu0 0.0
    %1972 = vmatpush1.msra.mxu0 0.0
    %1973 = vmatprep.subr.mxu0 0.0
    %1974 = vmatpush1.msra.mxu0 0.0
    %1975 = vmatprep.subr.mxu0 0.0
    %1976 = vmatpush1.msra.mxu0 0.0
    %1977 = vmatprep.subr.mxu0 0.0
    %1978 = vmatpush1.msra.mxu0 0.0
    %1979 = vmatprep.subr.mxu0 0.0
    %1980 = vmatpush1.msra.mxu0 0.0
    %1981 = vmatprep.subr.mxu0 0.0
    %1982 = vmatpush1.msra.mxu0 0.0
    %1983 = vmatprep.subr.mxu0 0.0
    %1984 = vmatpush1.msra.mxu0 0.0
    %1985 = vmatprep.subr.mxu0 0.0
    %1986 = vmatpush1.msra.mxu0 0.0
    %1987 = vmatprep.subr.mxu0 0.0
    %1988 = vmatpush1.msra.mxu0 0.0
    %1989 = vmatprep.subr.mxu0 0.0
    %1990 = vmatpush1.msra.mxu0 0.0
    %1991 = vmatprep.subr.mxu0 0.0
    %1992 = vmatpush1.msra.mxu0 0.0
    %1993 = vmatprep.subr.mxu0 0.0
    %1994 = vmatpush1.msra.mxu0 0.0
    %1995 = vmatprep.mubr.f32.mxu0 0.0
    %1996 = vmatmul.mubr.f32.gmra.mrb[0].mxu0 %v1913
    %v1997 = vpop.f32.mrb[0].mxu0
    %v1998 = vadd.f32 0.0, %v1997
    %v1999 = vpop.f32.mrb[0].mxu0
    %2000 = vdwg.mxu0
    %v2001 = vadd.f32 %v1912, %v1998
    %v2002 = vld [vmem:[%s6] sm:$0x1]
    %v2004 = vlaneseq
    %v2005 = vshrl.u32 %v2004, 7
    %v2006 = vsub.s32 0, %v2005
    %v2007 = vrot.slane %v2002, %v2006
    %v2009 = vadd.f32 %v2001, %v2007
    %v2010 = vmax.f32 %v2009, 0.0
    %v2011 = vld [vmem:[%s7] sm:$0xff]
    %v2012 = vld [vmem:[%s7 + $0x8] sm:$0xff]
    %v2013 = vld [vmem:[%s7 + $0x10] sm:$0xff]
    %v2014 = vld [vmem:[%s7 + $0x18] sm:$0xff]
    %v2015 = vld [vmem:[%s7 + $0x20] sm:$0xff]
    %v2016 = vld [vmem:[%s7 + $0x28] sm:$0xff]
    %v2017 = vld [vmem:[%s7 + $0x30] sm:$0xff]
    %v2018 = vld [vmem:[%s7 + $0x38] sm:$0xff]
    %v2019 = vld [vmem:[%s7 + $0x40] sm:$0xff]
    %v2020 = vld [vmem:[%s7 + $0x48] sm:$0xff]
    %v2021 = vld [vmem:[%s7 + $0x50] sm:$0xff]
    %v2022 = vld [vmem:[%s7 + $0x58] sm:$0xff]
    %v2023 = vld [vmem:[%s7 + $0x60] sm:$0xff]
    %v2024 = vld [vmem:[%s7 + $0x68] sm:$0xff]
    %v2025 = vld [vmem:[%s7 + $0x70] sm:$0xff]
    %v2026 = vld [vmem:[%s7 + $0x78] sm:$0xff]
    %v2027 = vld [vmem:[%s8] sm:$0x1]
    %v2029 = vlaneseq
    %v2030 = vshrl.u32 %v2029, 7
    %v2031 = vsub.s32 0, %v2030
    %v2032 = vrot.slane %v2027, %v2031
    %2034 = vmatprep.subr.mxu0 0.0
    %2035 = vmatpush1.msra.mxu0 %v2011
    %2036 = vmatprep.subr.mxu0 0.0
    %2037 = vmatpush1.msra.mxu0 %v2012
    %2038 = vmatprep.subr.mxu0 0.0
    %2039 = vmatpush1.msra.mxu0 %v2013
    %2040 = vmatprep.subr.mxu0 0.0
    %2041 = vmatpush1.msra.mxu0 %v2014
    %2042 = vmatprep.subr.mxu0 0.0
    %2043 = vmatpush1.msra.mxu0 %v2015
    %2044 = vmatprep.subr.mxu0 0.0
    %2045 = vmatpush1.msra.mxu0 %v2016
    %2046 = vmatprep.subr.mxu0 0.0
    %2047 = vmatpush1.msra.mxu0 %v2017
    %2048 = vmatprep.subr.mxu0 0.0
    %2049 = vmatpush1.msra.mxu0 %v2018
    %2050 = vmatprep.subr.mxu0 0.0
    %2051 = vmatpush1.msra.mxu0 %v2019
    %2052 = vmatprep.subr.mxu0 0.0
    %2053 = vmatpush1.msra.mxu0 %v2020
    %2054 = vmatprep.subr.mxu0 0.0
    %2055 = vmatpush1.msra.mxu0 %v2021
    %2056 = vmatprep.subr.mxu0 0.0
    %2057 = vmatpush1.msra.mxu0 %v2022
    %2058 = vmatprep.subr.mxu0 0.0
    %2059 = vmatpush1.msra.mxu0 %v2023
    %2060 = vmatprep.subr.mxu0 0.0
    %2061 = vmatpush1.msra.mxu0 %v2024
    %2062 = vmatprep.subr.mxu0 0.0
    %2063 = vmatpush1.msra.mxu0 %v2025
    %2064 = vmatprep.subr.mxu0 0.0
    %2065 = vmatpush1.msra.mxu0 %v2026
    %2066 = vmatprep.subr.mxu0 0.0
    %2067 = vmatpush1.msra.mxu0 0.0
    %2068 = vmatprep.subr.mxu0 0.0
    %2069 = vmatpush1.msra.mxu0 0.0
    %2070 = vmatprep.subr.mxu0 0.0
    %2071 = vmatpush1.msra.mxu0 0.0
    %2072 = vmatprep.subr.mxu0 0.0
    %2073 = vmatpush1.msra.mxu0 0.0
    %2074 = vmatprep.subr.mxu0 0.0
    %2075 = vmatpush1.msra.mxu0 0.0
    %2076 = vmatprep.subr.mxu0 0.0
    %2077 = vmatpush1.msra.mxu0 0.0
    %2078 = vmatprep.subr.mxu0 0.0
    %2079 = vmatpush1.msra.mxu0 0.0
    %2080 = vmatprep.subr.mxu0 0.0
    %2081 = vmatpush1.msra.mxu0 0.0
    %2082 = vmatprep.subr.mxu0 0.0
    %2083 = vmatpush1.msra.mxu0 0.0
    %2084 = vmatprep.subr.mxu0 0.0
    %2085 = vmatpush1.msra.mxu0 0.0
    %2086 = vmatprep.subr.mxu0 0.0
    %2087 = vmatpush1.msra.mxu0 0.0
    %2088 = vmatprep.subr.mxu0 0.0
    %2089 = vmatpush1.msra.mxu0 0.0
    %2090 = vmatprep.subr.mxu0 0.0
    %2091 = vmatpush1.msra.mxu0 0.0
    %2092 = vmatprep.subr.mxu0 0.0
    %2093 = vmatpush1.msra.mxu0 0.0
    %2094 = vmatprep.subr.mxu0 0.0
    %2095 = vmatpush1.msra.mxu0 0.0
    %2096 = vmatprep.subr.mxu0 0.0
    %2097 = vmatpush1.msra.mxu0 0.0
    %2098 = vmatprep.mubr.f32.mxu0 0.0
    %2099 = vmatmul.mubr.f32.gmra.mrb[0].mxu0 %v2010
    %v2100 = vpop.f32.mrb[0].mxu0
    %v2101 = vadd.f32 %v2032, %v2100
    %v2102 = vpop.f32.mrb[0].mxu0
    %2103 = vdwg.mxu0
    %2104 = vst [vmem:[#allocation4] sm:$0x3] %v2101
    // Predicated region
    $region38: #{basenet_v2_forward.1} parent=1 // pred_check
      _
    $region39: #{basenet_v2_forward.1} parent=1 // pred_check_branch
      %2106 = sbr.rel (0) target = $region41
    $region40: #{basenet_v2_forward.1} parent=1 // pred_region
      %s2108 = ssub.s32 32, 32
      %2109 = vsyncadd [#allocation5], %s2108
      %s2111 = sshll.u32 [#allocation4], 4
      %s2112 = int_to_ptr.vmem [resolvable:$true] %s2111
      %2114 = dma.vmem_to_hbm [thread:$0]  %s2112, 32, %s9, [#allocation5]
    $region41: #{basenet_v2_forward.1} parent=1 // pred_fallthru
      _
    // Predicated region
    $region42: #{basenet_v2_forward.1} parent=1 // pred_check
      _
    $region43: #{basenet_v2_forward.1} parent=1 // pred_check_branch
      %2116 = sbr.rel (0) target = $region45
    $region44: #{basenet_v2_forward.1} parent=1 // pred_region
      %2117 = dma.done [#allocation5], 32
    $region45: #{basenet_v2_forward.1} parent=1 // pred_fallthru
      _
    %2118 = vsyncpa [#allocation5], 1

</llo_original>
